<compile_context>
chip_gen: v7x
topology: tpu7x:2x2x1
jax: 0.10.0
libtpu: 0.0.40
codegen_flags: <defaults>
</compile_context>

<pallas_src>
import math
import functools

import numpy as np
import jax
import jax.numpy as jnp
from jax.experimental import pallas as pl
from jax.experimental.pallas import tpu as pltpu

_EPS = 1e-5  # nn.BatchNorm2d default eps


def _erf_f32(x):
    # TODO(synk): Mosaic has no erf primitive; Abramowitz & Stegun 7.1.26 polynomial
    # (|abs err| < 1.5e-7) so GELU matches torch's exact (erf-based) nn.GELU()
    # well within the test tolerance.
    a1, a2, a3, a4, a5 = (0.254829592, -0.284496736, 1.421413741,
                          -1.453152027, 1.061405429)
    p = 0.3275911
    ax = jnp.abs(x)
    t = 1.0 / (1.0 + p * ax)
    poly = ((((a5 * t + a4) * t + a3) * t + a2) * t + a1) * t
    y = 1.0 - poly * jnp.exp(-ax * ax)
    return jnp.where(x < 0, -y, y)


def _gelu_exact(x):
    return 0.5 * x * (1.0 + _erf_f32(x * (1.0 / math.sqrt(2.0))))


def _unet_down_kernel(N, H, W, Cin, Cout,
                      x_ref, masks_ref, sel_ref,
                      w1_ref, b1_ref, g1_ref, be1_ref,
                      w2_ref, b2_ref, g2_ref, be2_ref,
                      out_ref,
                      p1_ref, p2_ref):
    f32 = jnp.float32
    HW = H * W
    M = N * HW
    inv_m = 1.0 / M

    # ---- input (N*Cin, H*W) -> channel-major (Cin, M): per-image lane bands ----
    x_t = jnp.concatenate([x_ref[n * Cin:(n + 1) * Cin, :] for n in range(N)],
                          axis=1)                                    # (Cin, M)

    def conv3x3(src, w_ref, cin, p_ref):
        # Transposed im2col: 9 shifted/masked copies of src stored as full-lane-width
        # sublane bands of p_ref (9*cin, M), then ONE MXU matmul (Cout,9cin)x(9cin,M).
        for k in range(9):                       # static, unrolled at trace time
            dh, dw = k // 3 - 1, k % 3 - 1
            off = dh * W + dw                    # flat lane shift for this tap
            if off == 0:
                tap = src
            else:
                # rolled[m] = src[(m + off) % M]; image-edge / batch-boundary
                # crossings (incl. roll wraparound) are zeroed by the 0/1 mask.
                tap = pltpu.roll(src, (-off) % M, axis=1) * masks_ref[k:k + 1, :]
            p_ref[k * cin:(k + 1) * cin, :] = tap
        return jnp.dot(w_ref[...], p_ref[...], preferred_element_type=f32)  # (Cout, M)

    def bn_gelu(y, b_col, g_col, be_col):
        # Training-mode BatchNorm2d: per-channel batch stats over (N,H,W), biased
        # variance, two-pass (mean, then centered sum of squares) for stability,
        # followed by exact (erf) GELU.  All lane-dense (M on lanes).
        y = y + b_col                                                # conv bias
        mean = jnp.sum(y, axis=1, keepdims=True) * inv_m             # (Cout, 1)
        d = y - mean
        var = jnp.sum(d * d, axis=1, keepdims=True) * inv_m
        z = d * jax.lax.rsqrt(var + _EPS) * g_col + be_col
        return _gelu_exact(z)                                        # (Cout, M)

    # ---- conv1 -> BN -> GELU ----
    h1 = bn_gelu(conv3x3(x_t, w1_ref, Cin, p1_ref),
                 b1_ref[...], g1_ref[...], be1_ref[...])             # (Cout, M)
    # ---- conv2 -> BN -> GELU ----
    h2 = bn_gelu(conv3x3(h1, w2_ref, Cout, p2_ref),
                 b2_ref[...], g2_ref[...], be2_ref[...])             # (Cout, M)

    # ---- MaxPool2d(2), fused in (Cout, M) layout ----
    zh = jnp.maximum(h2, pltpu.roll(h2, M - 1, axis=1))   # w-pairs (valid at even w)
    zv = jnp.maximum(zh, pltpu.roll(zh, M - W, axis=1))   # h-pairs (valid at even h)
    # Compact the (even h, even w) positions to (Cout, N*Ho*Wo) with a 0/1
    # selection-matrix matmul on the otherwise-idle MXU -> lane-dense output store.
    out_ref[...] = jnp.dot(zv, sel_ref[...],
                           preferred_element_type=f32).astype(out_ref.dtype)


def _halo_and_pool_constants(N, H, W):
    """Per-tap boundary masks (9, M) and 2x2-pool selection matrix (M, N*Ho*Wo)."""
    M = N * H * W
    Ho, Wo = H // 2, W // 2
    Mo = N * Ho * Wo
    m = np.arange(M)
    h = (m // W) % H
    w = m % W
    masks = np.ones((9, M), np.float32)
    for k in range(9):
        dh, dw = k // 3 - 1, k % 3 - 1
        ok = (h + dh >= 0) & (h + dh < H) & (w + dw >= 0) & (w + dw < W)
        masks[k] = ok.astype(np.float32)
    j = np.arange(Mo)
    n = j // (Ho * Wo)
    h2 = (j // Wo) % Ho
    w2 = j % Wo
    src = n * H * W + (2 * h2) * W + (2 * w2)
    sel = np.zeros((M, Mo), np.float32)
    sel[src, j] = 1.0
    return jnp.asarray(masks), jnp.asarray(sel)


def unet_down(x_nchw, params):
    N, Cin, H, W = x_nchw.shape
    Cout = params["w1"].shape[0]
    assert H % 2 == 0 and W % 2 == 0, "MaxPool2d(2) needs even spatial dims"
    M = N * H * W
    Ho, Wo = H // 2, W // 2
    Mo = N * Ho * Wo

    # NCHW -> (N*Cin, H*W): free contiguous reshape (no wrapper transpose / HBM round trip).
    x2d = x_nchw.reshape(N * Cin, H * W).astype(jnp.float32)
    masks, sel = _halo_and_pool_constants(N, H, W)

    # torch Conv2d weight (Cout, Cin, 3, 3) -> (Cout, 9*Cin); K index = k*Cin + ci,
    # matching the transposed im2col slab rows built in the kernel.
    w1 = jnp.transpose(params["w1"], (0, 2, 3, 1)).reshape(Cout, 9 * Cin).astype(jnp.float32)
    w2 = jnp.transpose(params["w2"], (0, 2, 3, 1)).reshape(Cout, 9 * Cout).astype(jnp.float32)
    col = lambda v: v.reshape(Cout, 1).astype(jnp.float32)
    b1, g1, be1 = col(params["b1"]), col(params["g1"]), col(params["be1"])
    b2, g2, be2 = col(params["b2"]), col(params["g2"]), col(params["be2"])

    def full_spec(shape):
        nd = len(shape)
        return pl.BlockSpec(shape, lambda i, _nd=nd: (0,) * _nd)

    kernel = functools.partial(_unet_down_kernel, N, H, W, Cin, Cout)
    ins = [x2d, masks, sel, w1, b1, g1, be1, w2, b2, g2, be2]

    # TODO(synk): at realistic UNet sizes (C=64..256, larger N*H*W), tile the grid over
    # M-blocks with a two-phase BN (stats pass then apply pass), cast the patch slab /
    # weights to bf16 for the MXU, and mark the M axis "parallel" so v7x's two
    # TensorCores split it; at this toy size one grid step fits easily in VMEM.
    out_t = pl.pallas_call(
        kernel,
        out_shape=jax.ShapeDtypeStruct((Cout, Mo), jnp.float32),
        grid=(1,),
        in_specs=[full_spec(a.shape) for a in ins],
        out_specs=full_spec((Cout, Mo)),
        scratch_shapes=[
            pltpu.VMEM((9 * Cin, M), jnp.float32),    # conv1 transposed im2col slab
            pltpu.VMEM((9 * Cout, M), jnp.float32),   # conv2 transposed im2col slab
        ],
        compiler_params=pltpu.CompilerParams(
            dimension_semantics=("arbitrary",)),
    )(*ins)

    # (Cout, N*Ho*Wo) -> NCHW; only the small pooled result gets transposed.
    return jnp.transpose(out_t.reshape(Cout, N, Ho, Wo), (1, 0, 2, 3))


def unet_down_reference(x_nchw, p):
    """Pure-JAX reference of the same forward pass (for self-check)."""
    x = jnp.transpose(x_nchw, (0, 2, 3, 1)).astype(jnp.float32)

    def conv(h, w, b):
        return jax.lax.conv_general_dilated(
            h, jnp.transpose(w, (2, 3, 1, 0)), (1, 1), ((1, 1), (1, 1)),
            dimension_numbers=("NHWC", "HWIO", "NHWC")) + b

    def bn(h, g, be):
        m = jnp.mean(h, axis=(0, 1, 2), keepdims=True)
        v = jnp.mean((h - m) ** 2, axis=(0, 1, 2), keepdims=True)
        return (h - m) * jax.lax.rsqrt(v + _EPS) * g + be

    def gelu(h):
        return 0.5 * h * (1.0 + jax.lax.erf(h / jnp.float32(math.sqrt(2.0))))

    h = gelu(bn(conv(x, p["w1"], p["b1"]), p["g1"], p["be1"]))
    h = gelu(bn(conv(h, p["w2"], p["b2"]), p["g2"], p["be2"]))
    N, H, W, C = h.shape
    h = h.reshape(N, H // 2, 2, W // 2, 2, C).max(axis=(2, 4))
    return jnp.transpose(h, (0, 3, 1, 2))


if __name__ == "__main__":
    N, Cin, Cout, H, W = 2, 4, 8, 16, 16

    key = jax.random.PRNGKey(0)
    ks = jax.random.split(key, 9)
    params = {
        "w1": 0.2 * jax.random.normal(ks[0], (Cout, Cin, 3, 3), jnp.float32),
        "b1": 0.05 * jax.random.normal(ks[1], (Cout,), jnp.float32),
        "g1": 1.0 + 0.1 * jax.random.normal(ks[2], (Cout,), jnp.float32),
        "be1": 0.05 * jax.random.normal(ks[3], (Cout,), jnp.float32),
        "w2": 0.2 * jax.random.normal(ks[4], (Cout, Cout, 3, 3), jnp.float32),
        "b2": 0.05 * jax.random.normal(ks[5], (Cout,), jnp.float32),
        "g2": 1.0 + 0.1 * jax.random.normal(ks[6], (Cout,), jnp.float32),
        "be2": 0.05 * jax.random.normal(ks[7], (Cout,), jnp.float32),
    }
    x = jax.random.normal(ks[8], (N, Cin, H, W), jnp.float32)

    out = unet_down(x, params)
    out = jax.block_until_ready(out)
    assert out.shape == (N, Cout, H // 2, W // 2), out.shape

    ref = jax.block_until_ready(unet_down_reference(x, params))
    max_err = float(jnp.max(jnp.abs(out - ref)))
    assert max_err < 2e-3, f"mismatch vs reference: {max_err}"

    print("KERNEL_OK")
</pallas_src>

<mosaic_0001>
module attributes {stable_mosaic.version = 11 : i64} {
  func.func @_unet_down_kernel(%arg0: i32, %arg1: memref<8x256xf32, #tpu.memory_space<vmem>>, %arg2: memref<9x512xf32, #tpu.memory_space<vmem>>, %arg3: memref<512x128xf32, #tpu.memory_space<vmem>>, %arg4: memref<8x36xf32, #tpu.memory_space<vmem>>, %arg5: memref<8x1xf32, #tpu.memory_space<vmem>>, %arg6: memref<8x1xf32, #tpu.memory_space<vmem>>, %arg7: memref<8x1xf32, #tpu.memory_space<vmem>>, %arg8: memref<8x72xf32, #tpu.memory_space<vmem>>, %arg9: memref<8x1xf32, #tpu.memory_space<vmem>>, %arg10: memref<8x1xf32, #tpu.memory_space<vmem>>, %arg11: memref<8x1xf32, #tpu.memory_space<vmem>>, %arg12: memref<8x128xf32, #tpu.memory_space<vmem>>, %arg13: memref<36x512xf32, #tpu.memory_space<vmem>>, %arg14: memref<72x512xf32, #tpu.memory_space<vmem>>) attributes {dimension_semantics = [#tpu.dimension_semantics<arbitrary>], iteration_bounds = array<i64: 1>, scalar_prefetch = 0 : i64, scratch_operands = 2 : i64, tpu.core_type = #tpu.core_type<tc>, window_params = [{pipeline_mode = #tpu.pipeline_mode<synchronous>, transform_indices = @transform_0, window_bounds = array<i64: 8, 256>}, {pipeline_mode = #tpu.pipeline_mode<synchronous>, transform_indices = @transform_1, window_bounds = array<i64: 9, 512>}, {pipeline_mode = #tpu.pipeline_mode<synchronous>, transform_indices = @transform_2, window_bounds = array<i64: 512, 128>}, {pipeline_mode = #tpu.pipeline_mode<synchronous>, transform_indices = @transform_3, window_bounds = array<i64: 8, 36>}, {pipeline_mode = #tpu.pipeline_mode<synchronous>, transform_indices = @transform_4, window_bounds = array<i64: 8, 1>}, {pipeline_mode = #tpu.pipeline_mode<synchronous>, transform_indices = @transform_5, window_bounds = array<i64: 8, 1>}, {pipeline_mode = #tpu.pipeline_mode<synchronous>, transform_indices = @transform_6, window_bounds = array<i64: 8, 1>}, {pipeline_mode = #tpu.pipeline_mode<synchronous>, transform_indices = @transform_7, window_bounds = array<i64: 8, 72>}, {pipeline_mode = #tpu.pipeline_mode<synchronous>, transform_indices = @transform_8, window_bounds = array<i64: 8, 1>}, {pipeline_mode = #tpu.pipeline_mode<synchronous>, transform_indices = @transform_9, window_bounds = array<i64: 8, 1>}, {pipeline_mode = #tpu.pipeline_mode<synchronous>, transform_indices = @transform_10, window_bounds = array<i64: 8, 1>}, {pipeline_mode = #tpu.pipeline_mode<synchronous>, transform_indices = @transform_11, window_bounds = array<i64: 8, 128>}]} {
    %c0 = arith.constant 0 : index
    %c0_0 = arith.constant 0 : index
    %0 = vector.load %arg1[%c0, %c0_0] : memref<8x256xf32, #tpu.memory_space<vmem>>, vector<4x256xf32>
    %c4 = arith.constant 4 : index
    %c0_1 = arith.constant 0 : index
    %1 = vector.load %arg1[%c4, %c0_1] : memref<8x256xf32, #tpu.memory_space<vmem>>, vector<4x256xf32>
    %2 = tpu.concatenate %0, %1 in 1 : vector<4x256xf32>, vector<4x256xf32> -> vector<4x512xf32>
    %c17_i32 = arith.constant 17 : i32
    %3 = tpu.dynamic_rotate %2 by %c17_i32 dim 1 : vector<4x512xf32>, i32 -> vector<4x512xf32>
    %c0_2 = arith.constant 0 : index
    %c0_3 = arith.constant 0 : index
    %4 = vector.load %arg2[%c0_2, %c0_3] : memref<9x512xf32, #tpu.memory_space<vmem>>, vector<1x512xf32>
    %5 = vector.broadcast %4 : vector<1x512xf32> to vector<4x512xf32>
    %6 = arith.mulf %3, %5 : vector<4x512xf32>
    %c0_4 = arith.constant 0 : index
    %c0_5 = arith.constant 0 : index
    %7 = vector.load %arg13[%c0_4, %c0_5] : memref<36x512xf32, #tpu.memory_space<vmem>>, vector<4x512xf32>
    tpu.vector_store %arg13[%c0_4, %c0_5], %6 {strides = array<i32>} : memref<36x512xf32, #tpu.memory_space<vmem>>, vector<4x512xf32>,
    %c16_i32 = arith.constant 16 : i32
    %8 = tpu.dynamic_rotate %2 by %c16_i32 dim 1 : vector<4x512xf32>, i32 -> vector<4x512xf32>
    %c1 = arith.constant 1 : index
    %c0_6 = arith.constant 0 : index
    %9 = vector.load %arg2[%c1, %c0_6] : memref<9x512xf32, #tpu.memory_space<vmem>>, vector<1x512xf32>
    %10 = vector.broadcast %9 : vector<1x512xf32> to vector<4x512xf32>
    %11 = arith.mulf %8, %10 : vector<4x512xf32>
    %c4_7 = arith.constant 4 : index
    %c0_8 = arith.constant 0 : index
    %12 = vector.load %arg13[%c4_7, %c0_8] : memref<36x512xf32, #tpu.memory_space<vmem>>, vector<4x512xf32>
    tpu.vector_store %arg13[%c4_7, %c0_8], %11 {strides = array<i32>} : memref<36x512xf32, #tpu.memory_space<vmem>>, vector<4x512xf32>,
    %c15_i32 = arith.constant 15 : i32
    %13 = tpu.dynamic_rotate %2 by %c15_i32 dim 1 : vector<4x512xf32>, i32 -> vector<4x512xf32>
    %c2 = arith.constant 2 : index
    %c0_9 = arith.constant 0 : index
    %14 = vector.load %arg2[%c2, %c0_9] : memref<9x512xf32, #tpu.memory_space<vmem>>, vector<1x512xf32>
    %15 = vector.broadcast %14 : vector<1x512xf32> to vector<4x512xf32>
    %16 = arith.mulf %13, %15 : vector<4x512xf32>
    %c8 = arith.constant 8 : index
    %c0_10 = arith.constant 0 : index
    %17 = vector.load %arg13[%c8, %c0_10] : memref<36x512xf32, #tpu.memory_space<vmem>>, vector<4x512xf32>
    tpu.vector_store %arg13[%c8, %c0_10], %16 {strides = array<i32>} : memref<36x512xf32, #tpu.memory_space<vmem>>, vector<4x512xf32>,
    %c1_i32 = arith.constant 1 : i32
    %18 = tpu.dynamic_rotate %2 by %c1_i32 dim 1 : vector<4x512xf32>, i32 -> vector<4x512xf32>
    %c3 = arith.constant 3 : index
    %c0_11 = arith.constant 0 : index
    %19 = vector.load %arg2[%c3, %c0_11] : memref<9x512xf32, #tpu.memory_space<vmem>>, vector<1x512xf32>
    %20 = vector.broadcast %19 : vector<1x512xf32> to vector<4x512xf32>
    %21 = arith.mulf %18, %20 : vector<4x512xf32>
    %c12 = arith.constant 12 : index
    %c0_12 = arith.constant 0 : index
    %22 = vector.load %arg13[%c12, %c0_12] : memref<36x512xf32, #tpu.memory_space<vmem>>, vector<4x512xf32>
    tpu.vector_store %arg13[%c12, %c0_12], %21 {strides = array<i32>} : memref<36x512xf32, #tpu.memory_space<vmem>>, vector<4x512xf32>,
    %c16 = arith.constant 16 : index
    %c0_13 = arith.constant 0 : index
    %23 = vector.load %arg13[%c16, %c0_13] : memref<36x512xf32, #tpu.memory_space<vmem>>, vector<4x512xf32>
    tpu.vector_store %arg13[%c16, %c0_13], %2 {strides = array<i32>} : memref<36x512xf32, #tpu.memory_space<vmem>>, vector<4x512xf32>,
    %c511_i32 = arith.constant 511 : i32
    %24 = tpu.dynamic_rotate %2 by %c511_i32 dim 1 : vector<4x512xf32>, i32 -> vector<4x512xf32>
    %c5 = arith.constant 5 : index
    %c0_14 = arith.constant 0 : index
    %25 = vector.load %arg2[%c5, %c0_14] : memref<9x512xf32, #tpu.memory_space<vmem>>, vector<1x512xf32>
    %26 = vector.broadcast %25 : vector<1x512xf32> to vector<4x512xf32>
    %27 = arith.mulf %24, %26 : vector<4x512xf32>
    %c20 = arith.constant 20 : index
    %c0_15 = arith.constant 0 : index
    %28 = vector.load %arg13[%c20, %c0_15] : memref<36x512xf32, #tpu.memory_space<vmem>>, vector<4x512xf32>
    tpu.vector_store %arg13[%c20, %c0_15], %27 {strides = array<i32>} : memref<36x512xf32, #tpu.memory_space<vmem>>, vector<4x512xf32>,
    %c497_i32 = arith.constant 497 : i32
    %29 = tpu.dynamic_rotate %2 by %c497_i32 dim 1 : vector<4x512xf32>, i32 -> vector<4x512xf32>
    %c6 = arith.constant 6 : index
    %c0_16 = arith.constant 0 : index
    %30 = vector.load %arg2[%c6, %c0_16] : memref<9x512xf32, #tpu.memory_space<vmem>>, vector<1x512xf32>
    %31 = vector.broadcast %30 : vector<1x512xf32> to vector<4x512xf32>
    %32 = arith.mulf %29, %31 : vector<4x512xf32>
    %c24 = arith.constant 24 : index
    %c0_17 = arith.constant 0 : index
    %33 = vector.load %arg13[%c24, %c0_17] : memref<36x512xf32, #tpu.memory_space<vmem>>, vector<4x512xf32>
    tpu.vector_store %arg13[%c24, %c0_17], %32 {strides = array<i32>} : memref<36x512xf32, #tpu.memory_space<vmem>>, vector<4x512xf32>,
    %c496_i32 = arith.constant 496 : i32
    %34 = tpu.dynamic_rotate %2 by %c496_i32 dim 1 : vector<4x512xf32>, i32 -> vector<4x512xf32>
    %c7 = arith.constant 7 : index
    %c0_18 = arith.constant 0 : index
    %35 = vector.load %arg2[%c7, %c0_18] : memref<9x512xf32, #tpu.memory_space<vmem>>, vector<1x512xf32>
    %36 = vector.broadcast %35 : vector<1x512xf32> to vector<4x512xf32>
    %37 = arith.mulf %34, %36 : vector<4x512xf32>
    %c28 = arith.constant 28 : index
    %c0_19 = arith.constant 0 : index
    %38 = vector.load %arg13[%c28, %c0_19] : memref<36x512xf32, #tpu.memory_space<vmem>>, vector<4x512xf32>
    tpu.vector_store %arg13[%c28, %c0_19], %37 {strides = array<i32>} : memref<36x512xf32, #tpu.memory_space<vmem>>, vector<4x512xf32>,
    %c495_i32 = arith.constant 495 : i32
    %39 = tpu.dynamic_rotate %2 by %c495_i32 dim 1 : vector<4x512xf32>, i32 -> vector<4x512xf32>
    %c8_20 = arith.constant 8 : index
    %c0_21 = arith.constant 0 : index
    %40 = vector.load %arg2[%c8_20, %c0_21] : memref<9x512xf32, #tpu.memory_space<vmem>>, vector<1x512xf32>
    %41 = vector.broadcast %40 : vector<1x512xf32> to vector<4x512xf32>
    %42 = arith.mulf %39, %41 : vector<4x512xf32>
    %c32 = arith.constant 32 : index
    %c0_22 = arith.constant 0 : index
    %43 = vector.load %arg13[%c32, %c0_22] : memref<36x512xf32, #tpu.memory_space<vmem>>, vector<4x512xf32>
    tpu.vector_store %arg13[%c32, %c0_22], %42 {strides = array<i32>} : memref<36x512xf32, #tpu.memory_space<vmem>>, vector<4x512xf32>,
    %c0_23 = arith.constant 0 : index
    %c0_24 = arith.constant 0 : index
    %44 = vector.load %arg4[%c0_23, %c0_24] : memref<8x36xf32, #tpu.memory_space<vmem>>, vector<8x36xf32>
    %c0_25 = arith.constant 0 : index
    %c0_26 = arith.constant 0 : index
    %45 = vector.load %arg13[%c0_25, %c0_26] : memref<36x512xf32, #tpu.memory_space<vmem>>, vector<36x512xf32>
    %cst = arith.constant dense<0.000000e+00> : vector<8x512xf32>
    %46 = tpu.matmul %44, %45, %cst {dimension_numbers = #tpu.dot_dimension_numbers<[1], [0], [0], [1], [0, 0, 1, 1], [], []>} : vector<8x36xf32>, vector<36x512xf32>, vector<8x512xf32> -> vector<8x512xf32>
    %c0_27 = arith.constant 0 : index
    %c0_28 = arith.constant 0 : index
    %47 = vector.load %arg5[%c0_27, %c0_28] : memref<8x1xf32, #tpu.memory_space<vmem>>, vector<8x1xf32>
    %c0_29 = arith.constant 0 : index
    %c0_30 = arith.constant 0 : index
    %48 = vector.load %arg6[%c0_29, %c0_30] : memref<8x1xf32, #tpu.memory_space<vmem>>, vector<8x1xf32>
    %c0_31 = arith.constant 0 : index
    %c0_32 = arith.constant 0 : index
    %49 = vector.load %arg7[%c0_31, %c0_32] : memref<8x1xf32, #tpu.memory_space<vmem>>, vector<8x1xf32>
    %50 = vector.broadcast %47 : vector<8x1xf32> to vector<8x512xf32>
    %51 = arith.addf %46, %50 : vector<8x512xf32>
    %cst_33 = arith.constant dense<0.000000e+00> : vector<8xf32>
    %52 = vector.multi_reduction <add>, %51, %cst_33 [1] : vector<8x512xf32> to vector<8xf32>
    %53 = vector.shape_cast %52 : vector<8xf32> to vector<8x1xf32>
    %cst_34 = arith.constant 0.001953125 : f32
    %54 = vector.broadcast %cst_34 : f32 to vector<8x1xf32>
    %55 = arith.mulf %53, %54 : vector<8x1xf32>
    %56 = vector.broadcast %55 : vector<8x1xf32> to vector<8x512xf32>
    %57 = arith.subf %51, %56 : vector<8x512xf32>
    %58 = arith.mulf %57, %57 : vector<8x512xf32>
    %cst_35 = arith.constant dense<0.000000e+00> : vector<8xf32>
    %59 = vector.multi_reduction <add>, %58, %cst_35 [1] : vector<8x512xf32> to vector<8xf32>
    %60 = vector.shape_cast %59 : vector<8xf32> to vector<8x1xf32>
    %cst_36 = arith.constant 0.001953125 : f32
    %61 = vector.broadcast %cst_36 : f32 to vector<8x1xf32>
    %62 = arith.mulf %60, %61 : vector<8x1xf32>
    %cst_37 = arith.constant 9.99999974E-6 : f32
    %63 = vector.broadcast %cst_37 : f32 to vector<8x1xf32>
    %64 = arith.addf %62, %63 : vector<8x1xf32>
    %65 = math.rsqrt %64 : vector<8x1xf32>
    %66 = vector.broadcast %65 : vector<8x1xf32> to vector<8x512xf32>
    %67 = arith.mulf %57, %66 : vector<8x512xf32>
    %68 = vector.broadcast %48 : vector<8x1xf32> to vector<8x512xf32>
    %69 = arith.mulf %67, %68 : vector<8x512xf32>
    %70 = vector.broadcast %49 : vector<8x1xf32> to vector<8x512xf32>
    %71 = arith.addf %69, %70 : vector<8x512xf32>
    %cst_38 = arith.constant 5.000000e-01 : f32
    %72 = vector.broadcast %cst_38 : f32 to vector<8x512xf32>
    %73 = arith.mulf %72, %71 : vector<8x512xf32>
    %cst_39 = arith.constant 0.707106769 : f32
    %74 = vector.broadcast %cst_39 : f32 to vector<8x512xf32>
    %75 = arith.mulf %71, %74 : vector<8x512xf32>
    %76 = math.absf %75 : vector<8x512xf32>
    %cst_40 = arith.constant 0.327591091 : f32
    %77 = vector.broadcast %cst_40 : f32 to vector<8x512xf32>
    %78 = arith.mulf %77, %76 : vector<8x512xf32>
    %cst_41 = arith.constant 1.000000e+00 : f32
    %79 = vector.broadcast %cst_41 : f32 to vector<8x512xf32>
    %80 = arith.addf %79, %78 : vector<8x512xf32>
    %cst_42 = arith.constant 1.000000e+00 : f32
    %81 = vector.broadcast %cst_42 : f32 to vector<8x512xf32>
    %82 = arith.divf %81, %80 : vector<8x512xf32>
    %cst_43 = arith.constant 1.06140542 : f32
    %83 = vector.broadcast %cst_43 : f32 to vector<8x512xf32>
    %84 = arith.mulf %83, %82 : vector<8x512xf32>
    %cst_44 = arith.constant -1.45315206 : f32
    %85 = vector.broadcast %cst_44 : f32 to vector<8x512xf32>
    %86 = arith.addf %84, %85 : vector<8x512xf32>
    %87 = arith.mulf %86, %82 : vector<8x512xf32>
    %cst_45 = arith.constant 1.42141378 : f32
    %88 = vector.broadcast %cst_45 : f32 to vector<8x512xf32>
    %89 = arith.addf %87, %88 : vector<8x512xf32>
    %90 = arith.mulf %89, %82 : vector<8x512xf32>
    %cst_46 = arith.constant -0.284496725 : f32
    %91 = vector.broadcast %cst_46 : f32 to vector<8x512xf32>
    %92 = arith.addf %90, %91 : vector<8x512xf32>
    %93 = arith.mulf %92, %82 : vector<8x512xf32>
    %cst_47 = arith.constant 0.254829586 : f32
    %94 = vector.broadcast %cst_47 : f32 to vector<8x512xf32>
    %95 = arith.addf %93, %94 : vector<8x512xf32>
    %96 = arith.mulf %95, %82 : vector<8x512xf32>
    %cst_48 = arith.constant 0.000000e+00 : f32
    %97 = vector.broadcast %cst_48 : f32 to vector<8x512xf32>
    %98 = arith.subf %97, %76 : vector<8x512xf32>
    %99 = arith.mulf %98, %76 : vector<8x512xf32>
    %100 = math.exp %99 : vector<8x512xf32>
    %101 = arith.mulf %96, %100 : vector<8x512xf32>
    %cst_49 = arith.constant 1.000000e+00 : f32
    %102 = vector.broadcast %cst_49 : f32 to vector<8x512xf32>
    %103 = arith.subf %102, %101 : vector<8x512xf32>
    %cst_50 = arith.constant 0.000000e+00 : f32
    %104 = vector.broadcast %cst_50 : f32 to vector<8x512xf32>
    %105 = arith.cmpf olt, %75, %104 : vector<8x512xf32>
    %cst_51 = arith.constant 0.000000e+00 : f32
    %106 = vector.broadcast %cst_51 : f32 to vector<8x512xf32>
    %107 = arith.subf %106, %103 : vector<8x512xf32>
    %108 = arith.select %105, %107, %103 : vector<8x512xi1>, vector<8x512xf32>
    %cst_52 = arith.constant 1.000000e+00 : f32
    %109 = vector.broadcast %cst_52 : f32 to vector<8x512xf32>
    %110 = arith.addf %109, %108 : vector<8x512xf32>
    %111 = arith.mulf %73, %110 : vector<8x512xf32>
    %c17_i32_53 = arith.constant 17 : i32
    %112 = tpu.dynamic_rotate %111 by %c17_i32_53 dim 1 : vector<8x512xf32>, i32 -> vector<8x512xf32>
    %c0_54 = arith.constant 0 : index
    %c0_55 = arith.constant 0 : index
    %113 = vector.load %arg2[%c0_54, %c0_55] : memref<9x512xf32, #tpu.memory_space<vmem>>, vector<1x512xf32>
    %114 = vector.broadcast %113 : vector<1x512xf32> to vector<8x512xf32>
    %115 = arith.mulf %112, %114 : vector<8x512xf32>
    %c0_56 = arith.constant 0 : index
    %c0_57 = arith.constant 0 : index
    %116 = vector.load %arg14[%c0_56, %c0_57] : memref<72x512xf32, #tpu.memory_space<vmem>>, vector<8x512xf32>
    tpu.vector_store %arg14[%c0_56, %c0_57], %115 {strides = array<i32>} : memref<72x512xf32, #tpu.memory_space<vmem>>, vector<8x512xf32>,
    %c16_i32_58 = arith.constant 16 : i32
    %117 = tpu.dynamic_rotate %111 by %c16_i32_58 dim 1 : vector<8x512xf32>, i32 -> vector<8x512xf32>
    %c1_59 = arith.constant 1 : index
    %c0_60 = arith.constant 0 : index
    %118 = vector.load %arg2[%c1_59, %c0_60] : memref<9x512xf32, #tpu.memory_space<vmem>>, vector<1x512xf32>
    %119 = vector.broadcast %118 : vector<1x512xf32> to vector<8x512xf32>
    %120 = arith.mulf %117, %119 : vector<8x512xf32>
    %c8_61 = arith.constant 8 : index
    %c0_62 = arith.constant 0 : index
    %121 = vector.load %arg14[%c8_61, %c0_62] : memref<72x512xf32, #tpu.memory_space<vmem>>, vector<8x512xf32>
    tpu.vector_store %arg14[%c8_61, %c0_62], %120 {strides = array<i32>} : memref<72x512xf32, #tpu.memory_space<vmem>>, vector<8x512xf32>,
    %c15_i32_63 = arith.constant 15 : i32
    %122 = tpu.dynamic_rotate %111 by %c15_i32_63 dim 1 : vector<8x512xf32>, i32 -> vector<8x512xf32>
    %c2_64 = arith.constant 2 : index
    %c0_65 = arith.constant 0 : index
    %123 = vector.load %arg2[%c2_64, %c0_65] : memref<9x512xf32, #tpu.memory_space<vmem>>, vector<1x512xf32>
    %124 = vector.broadcast %123 : vector<1x512xf32> to vector<8x512xf32>
    %125 = arith.mulf %122, %124 : vector<8x512xf32>
    %c16_66 = arith.constant 16 : index
    %c0_67 = arith.constant 0 : index
    %126 = vector.load %arg14[%c16_66, %c0_67] : memref<72x512xf32, #tpu.memory_space<vmem>>, vector<8x512xf32>
    tpu.vector_store %arg14[%c16_66, %c0_67], %125 {strides = array<i32>} : memref<72x512xf32, #tpu.memory_space<vmem>>, vector<8x512xf32>,
    %c1_i32_68 = arith.constant 1 : i32
    %127 = tpu.dynamic_rotate %111 by %c1_i32_68 dim 1 : vector<8x512xf32>, i32 -> vector<8x512xf32>
    %c3_69 = arith.constant 3 : index
    %c0_70 = arith.constant 0 : index
    %128 = vector.load %arg2[%c3_69, %c0_70] : memref<9x512xf32, #tpu.memory_space<vmem>>, vector<1x512xf32>
    %129 = vector.broadcast %128 : vector<1x512xf32> to vector<8x512xf32>
    %130 = arith.mulf %127, %129 : vector<8x512xf32>
    %c24_71 = arith.constant 24 : index
    %c0_72 = arith.constant 0 : index
    %131 = vector.load %arg14[%c24_71, %c0_72] : memref<72x512xf32, #tpu.memory_space<vmem>>, vector<8x512xf32>
    tpu.vector_store %arg14[%c24_71, %c0_72], %130 {strides = array<i32>} : memref<72x512xf32, #tpu.memory_space<vmem>>, vector<8x512xf32>,
    %c32_73 = arith.constant 32 : index
    %c0_74 = arith.constant 0 : index
    %132 = vector.load %arg14[%c32_73, %c0_74] : memref<72x512xf32, #tpu.memory_space<vmem>>, vector<8x512xf32>
    tpu.vector_store %arg14[%c32_73, %c0_74], %111 {strides = array<i32>} : memref<72x512xf32, #tpu.memory_space<vmem>>, vector<8x512xf32>,
    %c511_i32_75 = arith.constant 511 : i32
    %133 = tpu.dynamic_rotate %111 by %c511_i32_75 dim 1 : vector<8x512xf32>, i32 -> vector<8x512xf32>
    %c5_76 = arith.constant 5 : index
    %c0_77 = arith.constant 0 : index
    %134 = vector.load %arg2[%c5_76, %c0_77] : memref<9x512xf32, #tpu.memory_space<vmem>>, vector<1x512xf32>
    %135 = vector.broadcast %134 : vector<1x512xf32> to vector<8x512xf32>
    %136 = arith.mulf %133, %135 : vector<8x512xf32>
    %c40 = arith.constant 40 : index
    %c0_78 = arith.constant 0 : index
    %137 = vector.load %arg14[%c40, %c0_78] : memref<72x512xf32, #tpu.memory_space<vmem>>, vector<8x512xf32>
    tpu.vector_store %arg14[%c40, %c0_78], %136 {strides = array<i32>} : memref<72x512xf32, #tpu.memory_space<vmem>>, vector<8x512xf32>,
    %c497_i32_79 = arith.constant 497 : i32
    %138 = tpu.dynamic_rotate %111 by %c497_i32_79 dim 1 : vector<8x512xf32>, i32 -> vector<8x512xf32>
    %c6_80 = arith.constant 6 : index
    %c0_81 = arith.constant 0 : index
    %139 = vector.load %arg2[%c6_80, %c0_81] : memref<9x512xf32, #tpu.memory_space<vmem>>, vector<1x512xf32>
    %140 = vector.broadcast %139 : vector<1x512xf32> to vector<8x512xf32>
    %141 = arith.mulf %138, %140 : vector<8x512xf32>
    %c48 = arith.constant 48 : index
    %c0_82 = arith.constant 0 : index
    %142 = vector.load %arg14[%c48, %c0_82] : memref<72x512xf32, #tpu.memory_space<vmem>>, vector<8x512xf32>
    tpu.vector_store %arg14[%c48, %c0_82], %141 {strides = array<i32>} : memref<72x512xf32, #tpu.memory_space<vmem>>, vector<8x512xf32>,
    %c496_i32_83 = arith.constant 496 : i32
    %143 = tpu.dynamic_rotate %111 by %c496_i32_83 dim 1 : vector<8x512xf32>, i32 -> vector<8x512xf32>
    %c7_84 = arith.constant 7 : index
    %c0_85 = arith.constant 0 : index
    %144 = vector.load %arg2[%c7_84, %c0_85] : memref<9x512xf32, #tpu.memory_space<vmem>>, vector<1x512xf32>
    %145 = vector.broadcast %144 : vector<1x512xf32> to vector<8x512xf32>
    %146 = arith.mulf %143, %145 : vector<8x512xf32>
    %c56 = arith.constant 56 : index
    %c0_86 = arith.constant 0 : index
    %147 = vector.load %arg14[%c56, %c0_86] : memref<72x512xf32, #tpu.memory_space<vmem>>, vector<8x512xf32>
    tpu.vector_store %arg14[%c56, %c0_86], %146 {strides = array<i32>} : memref<72x512xf32, #tpu.memory_space<vmem>>, vector<8x512xf32>,
    %c495_i32_87 = arith.constant 495 : i32
    %148 = tpu.dynamic_rotate %111 by %c495_i32_87 dim 1 : vector<8x512xf32>, i32 -> vector<8x512xf32>
    %c8_88 = arith.constant 8 : index
    %c0_89 = arith.constant 0 : index
    %149 = vector.load %arg2[%c8_88, %c0_89] : memref<9x512xf32, #tpu.memory_space<vmem>>, vector<1x512xf32>
    %150 = vector.broadcast %149 : vector<1x512xf32> to vector<8x512xf32>
    %151 = arith.mulf %148, %150 : vector<8x512xf32>
    %c64 = arith.constant 64 : index
    %c0_90 = arith.constant 0 : index
    %152 = vector.load %arg14[%c64, %c0_90] : memref<72x512xf32, #tpu.memory_space<vmem>>, vector<8x512xf32>
    tpu.vector_store %arg14[%c64, %c0_90], %151 {strides = array<i32>} : memref<72x512xf32, #tpu.memory_space<vmem>>, vector<8x512xf32>,
    %c0_91 = arith.constant 0 : index
    %c0_92 = arith.constant 0 : index
    %153 = vector.load %arg8[%c0_91, %c0_92] : memref<8x72xf32, #tpu.memory_space<vmem>>, vector<8x72xf32>
    %c0_93 = arith.constant 0 : index
    %c0_94 = arith.constant 0 : index
    %154 = vector.load %arg14[%c0_93, %c0_94] : memref<72x512xf32, #tpu.memory_space<vmem>>, vector<72x512xf32>
    %cst_95 = arith.constant dense<0.000000e+00> : vector<8x512xf32>
    %155 = tpu.matmul %153, %154, %cst_95 {dimension_numbers = #tpu.dot_dimension_numbers<[1], [0], [0], [1], [0, 0, 1, 1], [], []>} : vector<8x72xf32>, vector<72x512xf32>, vector<8x512xf32> -> vector<8x512xf32>
    %c0_96 = arith.constant 0 : index
    %c0_97 = arith.constant 0 : index
    %156 = vector.load %arg9[%c0_96, %c0_97] : memref<8x1xf32, #tpu.memory_space<vmem>>, vector<8x1xf32>
    %c0_98 = arith.constant 0 : index
    %c0_99 = arith.constant 0 : index
    %157 = vector.load %arg10[%c0_98, %c0_99] : memref<8x1xf32, #tpu.memory_space<vmem>>, vector<8x1xf32>
    %c0_100 = arith.constant 0 : index
    %c0_101 = arith.constant 0 : index
    %158 = vector.load %arg11[%c0_100, %c0_101] : memref<8x1xf32, #tpu.memory_space<vmem>>, vector<8x1xf32>
    %159 = vector.broadcast %156 : vector<8x1xf32> to vector<8x512xf32>
    %160 = arith.addf %155, %159 : vector<8x512xf32>
    %cst_102 = arith.constant dense<0.000000e+00> : vector<8xf32>
    %161 = vector.multi_reduction <add>, %160, %cst_102 [1] : vector<8x512xf32> to vector<8xf32>
    %162 = vector.shape_cast %161 : vector<8xf32> to vector<8x1xf32>
    %cst_103 = arith.constant 0.001953125 : f32
    %163 = vector.broadcast %cst_103 : f32 to vector<8x1xf32>
    %164 = arith.mulf %162, %163 : vector<8x1xf32>
    %165 = vector.broadcast %164 : vector<8x1xf32> to vector<8x512xf32>
    %166 = arith.subf %160, %165 : vector<8x512xf32>
    %167 = arith.mulf %166, %166 : vector<8x512xf32>
    %cst_104 = arith.constant dense<0.000000e+00> : vector<8xf32>
    %168 = vector.multi_reduction <add>, %167, %cst_104 [1] : vector<8x512xf32> to vector<8xf32>
    %169 = vector.shape_cast %168 : vector<8xf32> to vector<8x1xf32>
    %cst_105 = arith.constant 0.001953125 : f32
    %170 = vector.broadcast %cst_105 : f32 to vector<8x1xf32>
    %171 = arith.mulf %169, %170 : vector<8x1xf32>
    %cst_106 = arith.constant 9.99999974E-6 : f32
    %172 = vector.broadcast %cst_106 : f32 to vector<8x1xf32>
    %173 = arith.addf %171, %172 : vector<8x1xf32>
    %174 = math.rsqrt %173 : vector<8x1xf32>
    %175 = vector.broadcast %174 : vector<8x1xf32> to vector<8x512xf32>
    %176 = arith.mulf %166, %175 : vector<8x512xf32>
    %177 = vector.broadcast %157 : vector<8x1xf32> to vector<8x512xf32>
    %178 = arith.mulf %176, %177 : vector<8x512xf32>
    %179 = vector.broadcast %158 : vector<8x1xf32> to vector<8x512xf32>
    %180 = arith.addf %178, %179 : vector<8x512xf32>
    %cst_107 = arith.constant 5.000000e-01 : f32
    %181 = vector.broadcast %cst_107 : f32 to vector<8x512xf32>
    %182 = arith.mulf %181, %180 : vector<8x512xf32>
    %cst_108 = arith.constant 0.707106769 : f32
    %183 = vector.broadcast %cst_108 : f32 to vector<8x512xf32>
    %184 = arith.mulf %180, %183 : vector<8x512xf32>
    %185 = math.absf %184 : vector<8x512xf32>
    %cst_109 = arith.constant 0.327591091 : f32
    %186 = vector.broadcast %cst_109 : f32 to vector<8x512xf32>
    %187 = arith.mulf %186, %185 : vector<8x512xf32>
    %cst_110 = arith.constant 1.000000e+00 : f32
    %188 = vector.broadcast %cst_110 : f32 to vector<8x512xf32>
    %189 = arith.addf %188, %187 : vector<8x512xf32>
    %cst_111 = arith.constant 1.000000e+00 : f32
    %190 = vector.broadcast %cst_111 : f32 to vector<8x512xf32>
    %191 = arith.divf %190, %189 : vector<8x512xf32>
    %cst_112 = arith.constant 1.06140542 : f32
    %192 = vector.broadcast %cst_112 : f32 to vector<8x512xf32>
    %193 = arith.mulf %192, %191 : vector<8x512xf32>
    %cst_113 = arith.constant -1.45315206 : f32
    %194 = vector.broadcast %cst_113 : f32 to vector<8x512xf32>
    %195 = arith.addf %193, %194 : vector<8x512xf32>
    %196 = arith.mulf %195, %191 : vector<8x512xf32>
    %cst_114 = arith.constant 1.42141378 : f32
    %197 = vector.broadcast %cst_114 : f32 to vector<8x512xf32>
    %198 = arith.addf %196, %197 : vector<8x512xf32>
    %199 = arith.mulf %198, %191 : vector<8x512xf32>
    %cst_115 = arith.constant -0.284496725 : f32
    %200 = vector.broadcast %cst_115 : f32 to vector<8x512xf32>
    %201 = arith.addf %199, %200 : vector<8x512xf32>
    %202 = arith.mulf %201, %191 : vector<8x512xf32>
    %cst_116 = arith.constant 0.254829586 : f32
    %203 = vector.broadcast %cst_116 : f32 to vector<8x512xf32>
    %204 = arith.addf %202, %203 : vector<8x512xf32>
    %205 = arith.mulf %204, %191 : vector<8x512xf32>
    %cst_117 = arith.constant 0.000000e+00 : f32
    %206 = vector.broadcast %cst_117 : f32 to vector<8x512xf32>
    %207 = arith.subf %206, %185 : vector<8x512xf32>
    %208 = arith.mulf %207, %185 : vector<8x512xf32>
    %209 = math.exp %208 : vector<8x512xf32>
    %210 = arith.mulf %205, %209 : vector<8x512xf32>
    %cst_118 = arith.constant 1.000000e+00 : f32
    %211 = vector.broadcast %cst_118 : f32 to vector<8x512xf32>
    %212 = arith.subf %211, %210 : vector<8x512xf32>
    %cst_119 = arith.constant 0.000000e+00 : f32
    %213 = vector.broadcast %cst_119 : f32 to vector<8x512xf32>
    %214 = arith.cmpf olt, %184, %213 : vector<8x512xf32>
    %cst_120 = arith.constant 0.000000e+00 : f32
    %215 = vector.broadcast %cst_120 : f32 to vector<8x512xf32>
    %216 = arith.subf %215, %212 : vector<8x512xf32>
    %217 = arith.select %214, %216, %212 : vector<8x512xi1>, vector<8x512xf32>
    %cst_121 = arith.constant 1.000000e+00 : f32
    %218 = vector.broadcast %cst_121 : f32 to vector<8x512xf32>
    %219 = arith.addf %218, %217 : vector<8x512xf32>
    %220 = arith.mulf %182, %219 : vector<8x512xf32>
    %c511_i32_122 = arith.constant 511 : i32
    %221 = tpu.dynamic_rotate %220 by %c511_i32_122 dim 1 : vector<8x512xf32>, i32 -> vector<8x512xf32>
    %222 = arith.maximumf %220, %221 : vector<8x512xf32>
    %c496_i32_123 = arith.constant 496 : i32
    %223 = tpu.dynamic_rotate %222 by %c496_i32_123 dim 1 : vector<8x512xf32>, i32 -> vector<8x512xf32>
    %224 = arith.maximumf %222, %223 : vector<8x512xf32>
    %c0_124 = arith.constant 0 : index
    %c0_125 = arith.constant 0 : index
    %225 = vector.load %arg3[%c0_124, %c0_125] : memref<512x128xf32, #tpu.memory_space<vmem>>, vector<512x128xf32>
    %cst_126 = arith.constant dense<0.000000e+00> : vector<8x128xf32>
    %226 = tpu.matmul %224, %225, %cst_126 {dimension_numbers = #tpu.dot_dimension_numbers<[1], [0], [0], [1], [0, 0, 1, 1], [], []>} : vector<8x512xf32>, vector<512x128xf32>, vector<8x128xf32> -> vector<8x128xf32>
    %c0_127 = arith.constant 0 : index
    %c0_128 = arith.constant 0 : index
    %227 = vector.load %arg12[%c0_127, %c0_128] : memref<8x128xf32, #tpu.memory_space<vmem>>, vector<8x128xf32>
    tpu.vector_store %arg12[%c0_127, %c0_128], %226 {strides = array<i32>} : memref<8x128xf32, #tpu.memory_space<vmem>>, vector<8x128xf32>,
    return
  }
  func.func @transform_0(%arg0: i32) -> (i32, i32) {
    %c0_i32 = arith.constant 0 : i32
    %c0_i32_0 = arith.constant 0 : i32
    %c0_i32_1 = arith.constant 0 : i32
    return %c0_i32, %c0_i32_0 : i32, i32
  }
  func.func @transform_1(%arg0: i32) -> (i32, i32) {
    %c0_i32 = arith.constant 0 : i32
    %c0_i32_0 = arith.constant 0 : i32
    %c0_i32_1 = arith.constant 0 : i32
    return %c0_i32, %c0_i32_0 : i32, i32
  }
  func.func @transform_2(%arg0: i32) -> (i32, i32) {
    %c0_i32 = arith.constant 0 : i32
    %c0_i32_0 = arith.constant 0 : i32
    %c0_i32_1 = arith.constant 0 : i32
    return %c0_i32, %c0_i32_0 : i32, i32
  }
  func.func @transform_3(%arg0: i32) -> (i32, i32) {
    %c0_i32 = arith.constant 0 : i32
    %c0_i32_0 = arith.constant 0 : i32
    %c0_i32_1 = arith.constant 0 : i32
    return %c0_i32, %c0_i32_0 : i32, i32
  }
  func.func @transform_4(%arg0: i32) -> (i32, i32) {
    %c0_i32 = arith.constant 0 : i32
    %c0_i32_0 = arith.constant 0 : i32
    %c0_i32_1 = arith.constant 0 : i32
    return %c0_i32, %c0_i32_0 : i32, i32
  }
  func.func @transform_5(%arg0: i32) -> (i32, i32) {
    %c0_i32 = arith.constant 0 : i32
    %c0_i32_0 = arith.constant 0 : i32
    %c0_i32_1 = arith.constant 0 : i32
    return %c0_i32, %c0_i32_0 : i32, i32
  }
  func.func @transform_6(%arg0: i32) -> (i32, i32) {
    %c0_i32 = arith.constant 0 : i32
    %c0_i32_0 = arith.constant 0 : i32
    %c0_i32_1 = arith.constant 0 : i32
    return %c0_i32, %c0_i32_0 : i32, i32
  }
  func.func @transform_7(%arg0: i32) -> (i32, i32) {
    %c0_i32 = arith.constant 0 : i32
    %c0_i32_0 = arith.constant 0 : i32
    %c0_i32_1 = arith.constant 0 : i32
    return %c0_i32, %c0_i32_0 : i32, i32
  }
  func.func @transform_8(%arg0: i32) -> (i32, i32) {
    %c0_i32 = arith.constant 0 : i32
    %c0_i32_0 = arith.constant 0 : i32
    %c0_i32_1 = arith.constant 0 : i32
    return %c0_i32, %c0_i32_0 : i32, i32
  }
  func.func @transform_9(%arg0: i32) -> (i32, i32) {
    %c0_i32 = arith.constant 0 : i32
    %c0_i32_0 = arith.constant 0 : i32
    %c0_i32_1 = arith.constant 0 : i32
    return %c0_i32, %c0_i32_0 : i32, i32
  }
  func.func @transform_10(%arg0: i32) -> (i32, i32) {
    %c0_i32 = arith.constant 0 : i32
    %c0_i32_0 = arith.constant 0 : i32
    %c0_i32_1 = arith.constant 0 : i32
    return %c0_i32, %c0_i32_0 : i32, i32
  }
  func.func @transform_11(%arg0: i32) -> (i32, i32) {
    %c0_i32 = arith.constant 0 : i32
    %c0_i32_0 = arith.constant 0 : i32
    %c0_i32_1 = arith.constant 0 : i32
    return %c0_i32, %c0_i32_0 : i32, i32
  }
}

</mosaic_0001>

<llo_original>
// kernel: tpu_custom_call.1
$region0: #{tpu_custom_call.1}
  #allocation0 [shape = 'u32[]', space=smem, size = 0x4, offset = 0x4, fixed_abs, tag = 'smem constant byte address 0x4 - core index']
  #allocation1 [shape = 'u32[144,128]{1,0:T(1,128)}', space=vmem, size = 0x12000, scoped, tag = 'internal scratch']
  #allocation2 [shape = 'f32[36,512]{1,0:T(8,128)}', space=vmem, size = 0x14000, scoped, tag = 'scratch operand']
  #allocation3 [shape = 'f32[72,512]{1,0:T(8,128)}', space=vmem, size = 0x24000, scoped, tag = 'scratch operand']
  %s0 = inlined_call_operand.vmem [shape: f32[8,256], index: 0, kind: input, shape index: {}]
  %s1 = inlined_call_operand.hbm [shape: f32[9,512], index: 1, kind: input, shape index: {}]
  %s2 = inlined_call_operand.hbm [shape: f32[512,128], index: 2, kind: input, shape index: {}]
  %s3 = inlined_call_operand.vmem [shape: f32[8,36], index: 3, kind: input, shape index: {}]
  %s4 = inlined_call_operand.vmem [shape: f32[8,1], index: 4, kind: input, shape index: {}]
  %s5 = inlined_call_operand.vmem [shape: f32[8,1], index: 5, kind: input, shape index: {}]
  %s6 = inlined_call_operand.vmem [shape: f32[8,1], index: 6, kind: input, shape index: {}]
  %s7 = inlined_call_operand.vmem [shape: f32[8,72], index: 7, kind: input, shape index: {}]
  %s8 = inlined_call_operand.vmem [shape: f32[8,1], index: 8, kind: input, shape index: {}]
  %s9 = inlined_call_operand.vmem [shape: f32[8,1], index: 9, kind: input, shape index: {}]
  %s10 = inlined_call_operand.vmem [shape: f32[8,1], index: 10, kind: input, shape index: {}]
  %s11 = inlined_call_operand.hbm [shape: f32[8,128], index: 11, kind: output, shape index: {}]
  %s12 = sld [smem:[#allocation0]]
  $region62: #{tpu_custom_call.1} parent=0
    _
  %s14 = ssub.s32 1, %s12
  %s15 = scalar_select 0, %s14, %s12
  $region1: #{tpu_custom_call.1} parent=0
    #allocation4 [shape = 'u8[32768]{0}', space=vmem, size = 0x8000, scoped, tag = 'input window, operand 1, single buffered']
    #allocation5 [shape = 's32[1]{0}', space=sflag, size = 0x4, scoped, tag = 'scoped memory for tpu_custom_call.1']
    #allocation6 [shape = 's32[1]{0}', space=sflag, size = 0x4, scoped, tag = 'scoped memory for tpu_custom_call.1']
    #allocation7 [shape = 'u8[262144]{0}', space=vmem, size = 0x40000, scoped, tag = 'input window, operand 2, single buffered']
    #allocation8 [shape = 's32[1]{0}', space=sflag, size = 0x4, scoped, tag = 'scoped memory for tpu_custom_call.1']
    #allocation9 [shape = 'u8[4096]{0}', space=vmem, size = 0x1000, scoped, tag = 'output window, operand 0, single buffered']
    %16 = vsyncpa [#allocation5], 0
    %17 = vsyncpa [#allocation8], 0
    %18 = vsyncpa [#allocation6], 0
    // Predicated region
    $region2: #{tpu_custom_call.1} parent=1 // pred_check
      _
    $region3: #{tpu_custom_call.1} parent=1 // pred_check_branch
      %20 = sbr.rel (0) target = $region5
    $region4: #{tpu_custom_call.1} parent=1 // pred_region
      _
    $region5: #{tpu_custom_call.1} parent=1 // pred_fallthru
      _
    // Predicated region
    $region6: #{tpu_custom_call.1} parent=1 // pred_check
      _
    $region7: #{tpu_custom_call.1} parent=1 // pred_check_branch
      %22 = sbr.rel (0) target = $region9
    $region8: #{tpu_custom_call.1} parent=1 // pred_region
      %s24 = ssub.s32 1024, 1024
      %25 = vsyncadd [#allocation5], %s24
      %s26 = sshll.u32 [#allocation4], 4
      %s27 = int_to_ptr.vmem [resolvable:$true] %s26
      %32 = dma.hbm_to_vmem [thread:$0]  %s1, 1024, %s27, [#allocation5], 512, 512, 32
    $region9: #{tpu_custom_call.1} parent=1 // pred_fallthru
      _
    // Predicated region
    $region10: #{tpu_custom_call.1} parent=1 // pred_check
      _
    $region11: #{tpu_custom_call.1} parent=1 // pred_check_branch
      %34 = sbr.rel (0) target = $region13
    $region12: #{tpu_custom_call.1} parent=1 // pred_region
      %s36 = ssub.s32 8192, 8192
      %37 = vsyncadd [#allocation8], %s36
      %s38 = sshll.u32 [#allocation7], 4
      %s39 = int_to_ptr.vmem [resolvable:$true] %s38
      %44 = dma.hbm_to_vmem [thread:$0]  %s2, 8192, %s39, [#allocation8], 128, 128, 8
    $region13: #{tpu_custom_call.1} parent=1 // pred_fallthru
      _
    // Predicated region
    $region14: #{tpu_custom_call.1} parent=1 // pred_check
      _
    $region15: #{tpu_custom_call.1} parent=1 // pred_check_branch
      %46 = sbr.rel (0) target = $region17
    $region16: #{tpu_custom_call.1} parent=1 // pred_region
      _
    $region17: #{tpu_custom_call.1} parent=1 // pred_fallthru
      _
    // Predicated region
    $region18: #{tpu_custom_call.1} parent=1 // pred_check
      _
    $region19: #{tpu_custom_call.1} parent=1 // pred_check_branch
      %48 = sbr.rel (0) target = $region21
    $region20: #{tpu_custom_call.1} parent=1 // pred_region
      _
    $region21: #{tpu_custom_call.1} parent=1 // pred_fallthru
      _
    // Predicated region
    $region22: #{tpu_custom_call.1} parent=1 // pred_check
      _
    $region23: #{tpu_custom_call.1} parent=1 // pred_check_branch
      %50 = sbr.rel (0) target = $region25
    $region24: #{tpu_custom_call.1} parent=1 // pred_region
      _
    $region25: #{tpu_custom_call.1} parent=1 // pred_fallthru
      _
    // Predicated region
    $region26: #{tpu_custom_call.1} parent=1 // pred_check
      _
    $region27: #{tpu_custom_call.1} parent=1 // pred_check_branch
      %52 = sbr.rel (0) target = $region29
    $region28: #{tpu_custom_call.1} parent=1 // pred_region
      _
    $region29: #{tpu_custom_call.1} parent=1 // pred_fallthru
      _
    // Predicated region
    $region30: #{tpu_custom_call.1} parent=1 // pred_check
      _
    $region31: #{tpu_custom_call.1} parent=1 // pred_check_branch
      %54 = sbr.rel (0) target = $region33
    $region32: #{tpu_custom_call.1} parent=1 // pred_region
      _
    $region33: #{tpu_custom_call.1} parent=1 // pred_fallthru
      _
    // Predicated region
    $region34: #{tpu_custom_call.1} parent=1 // pred_check
      _
    $region35: #{tpu_custom_call.1} parent=1 // pred_check_branch
      %56 = sbr.rel (0) target = $region37
    $region36: #{tpu_custom_call.1} parent=1 // pred_region
      _
    $region37: #{tpu_custom_call.1} parent=1 // pred_fallthru
      _
    // Predicated region
    $region38: #{tpu_custom_call.1} parent=1 // pred_check
      _
    $region39: #{tpu_custom_call.1} parent=1 // pred_check_branch
      %58 = sbr.rel (0) target = $region41
    $region40: #{tpu_custom_call.1} parent=1 // pred_region
      _
    $region41: #{tpu_custom_call.1} parent=1 // pred_fallthru
      _
    // Predicated region
    $region42: #{tpu_custom_call.1} parent=1 // pred_check
      _
    $region43: #{tpu_custom_call.1} parent=1 // pred_check_branch
      %60 = sbr.rel (0) target = $region45
    $region44: #{tpu_custom_call.1} parent=1 // pred_region
      _
    $region45: #{tpu_custom_call.1} parent=1 // pred_fallthru
      _
    // Predicated region
    $region46: #{tpu_custom_call.1} parent=1 // pred_check
      _
    $region47: #{tpu_custom_call.1} parent=1 // pred_check_branch
      %62 = sbr.rel (0) target = $region49
    $region48: #{tpu_custom_call.1} parent=1 // pred_region
      %63 = dma.done [#allocation5], 1024
    $region49: #{tpu_custom_call.1} parent=1 // pred_fallthru
      _
    // Predicated region
    $region50: #{tpu_custom_call.1} parent=1 // pred_check
      _
    $region51: #{tpu_custom_call.1} parent=1 // pred_check_branch
      %65 = sbr.rel (0) target = $region53
    $region52: #{tpu_custom_call.1} parent=1 // pred_region
      %66 = dma.done [#allocation8], 8192
    $region53: #{tpu_custom_call.1} parent=1 // pred_fallthru
      _
    %v67 = vld [vmem:[%s0] sm:$0xf]
    %v68 = vld [vmem:[%s0 + $0x8] sm:$0xf]
    %v69 = vld [vmem:[%s0] sm:$0xf0]
    %v70 = vld [vmem:[%s0 + $0x8] sm:$0xf0]
    %v73 = vrot.slane %v69, 4
    %v74 = vrot.slane %v70, 4
    %77 = vrot.lane.b32.xlu0 %v67, 17
    %v78 = vpop.permute.xlu0 %77
    %79 = vrot.lane.b32.xlu0 %v68, 17
    %v80 = vpop.permute.xlu0 %79
    %81 = vrot.lane.b32.xlu0 %v73, 17
    %v82 = vpop.permute.xlu0 %81
    %83 = vrot.lane.b32.xlu0 %v74, 17
    %v84 = vpop.permute.xlu0 %83
    %v85 = vlaneseq
    %v86 = vand.u32 %v85, 127
    %vm87 = vcmp.lt.s32.totalorder %v86, 17
    %v88 = vsel %vm87, %v82, %v84
    %v89 = vsel %vm87, %v80, %v82
    %v90 = vsel %vm87, %v78, %v80
    %v91 = vsel %vm87, %v84, %v78
    %v92 = vld [vmem:[#allocation4] ss:$8 sm:$0xf]
    %v94 = vlaneseq
    %v95 = vshrl.u32 %v94, 7
    %v96 = vsub.s32 0, %v95
    %v97 = vrot.slane %v92, %v96
    %v98 = vlaneseq
    %v99 = vshrl.u32 %v98, 7
    %v100 = vsub.s32 1, %v99
    %v101 = vrot.slane %v92, %v100
    %v102 = vlaneseq
    %v103 = vshrl.u32 %v102, 7
    %v104 = vsub.s32 2, %v103
    %v105 = vrot.slane %v92, %v104
    %v106 = vlaneseq
    %v107 = vshrl.u32 %v106, 7
    %v108 = vsub.s32 3, %v107
    %v109 = vrot.slane %v92, %v108
    %v114 = vmul.f32 %v91, %v97
    %v115 = vmul.f32 %v90, %v101
    %v116 = vmul.f32 %v89, %v105
    %v117 = vmul.f32 %v88, %v109
    %118 = vst [vmem:[#allocation2] sm:$0xf] %v114
    %119 = vst [vmem:[#allocation2 + $0x8] sm:$0xf] %v115
    %120 = vst [vmem:[#allocation2 + $0x10] sm:$0xf] %v116
    %121 = vst [vmem:[#allocation2 + $0x18] sm:$0xf] %v117
    %122 = vrot.lane.b32.xlu0 %v67, 16
    %v123 = vpop.permute.xlu0 %122
    %124 = vrot.lane.b32.xlu0 %v68, 16
    %v125 = vpop.permute.xlu0 %124
    %126 = vrot.lane.b32.xlu0 %v73, 16
    %v127 = vpop.permute.xlu0 %126
    %128 = vrot.lane.b32.xlu0 %v74, 16
    %v129 = vpop.permute.xlu0 %128
    %vm130 = vcmp.lt.s32.totalorder %v86, 16
    %v131 = vsel %vm130, %v127, %v129
    %v132 = vsel %vm130, %v125, %v127
    %v133 = vsel %vm130, %v123, %v125
    %v134 = vsel %vm130, %v129, %v123
    %s135 = scalar_lea.vmem [#allocation4], 1
    %v136 = vld [vmem:[%s135] ss:$8 sm:$0xf]
    %v138 = vlaneseq
    %v139 = vshrl.u32 %v138, 7
    %v140 = vsub.s32 0, %v139
    %v141 = vrot.slane %v136, %v140
    %v142 = vlaneseq
    %v143 = vshrl.u32 %v142, 7
    %v144 = vsub.s32 1, %v143
    %v145 = vrot.slane %v136, %v144
    %v146 = vlaneseq
    %v147 = vshrl.u32 %v146, 7
    %v148 = vsub.s32 2, %v147
    %v149 = vrot.slane %v136, %v148
    %v150 = vlaneseq
    %v151 = vshrl.u32 %v150, 7
    %v152 = vsub.s32 3, %v151
    %v153 = vrot.slane %v136, %v152
    %v158 = vmul.f32 %v134, %v141
    %v159 = vmul.f32 %v133, %v145
    %v160 = vmul.f32 %v132, %v149
    %v161 = vmul.f32 %v131, %v153
    %v166 = vrot.slane %v158, 4
    %v167 = vrot.slane %v159, 4
    %v168 = vrot.slane %v160, 4
    %v169 = vrot.slane %v161, 4
    %174 = vst [vmem:[#allocation2] sm:$0xf0] %v166
    %175 = vst [vmem:[#allocation2 + $0x8] sm:$0xf0] %v167
    %176 = vst [vmem:[#allocation2 + $0x10] sm:$0xf0] %v168
    %177 = vst [vmem:[#allocation2 + $0x18] sm:$0xf0] %v169
    %178 = vrot.lane.b32.xlu0 %v67, 15
    %v179 = vpop.permute.xlu0 %178
    %180 = vrot.lane.b32.xlu0 %v68, 15
    %v181 = vpop.permute.xlu0 %180
    %182 = vrot.lane.b32.xlu0 %v73, 15
    %v183 = vpop.permute.xlu0 %182
    %184 = vrot.lane.b32.xlu0 %v74, 15
    %v185 = vpop.permute.xlu0 %184
    %vm186 = vcmp.lt.s32.totalorder %v86, 15
    %v187 = vsel %vm186, %v183, %v185
    %v188 = vsel %vm186, %v181, %v183
    %v189 = vsel %vm186, %v179, %v181
    %v190 = vsel %vm186, %v185, %v179
    %s191 = scalar_lea.vmem [#allocation4], 2
    %v192 = vld [vmem:[%s191] ss:$8 sm:$0xf]
    %v194 = vlaneseq
    %v195 = vshrl.u32 %v194, 7
    %v196 = vsub.s32 0, %v195
    %v197 = vrot.slane %v192, %v196
    %v198 = vlaneseq
    %v199 = vshrl.u32 %v198, 7
    %v200 = vsub.s32 1, %v199
    %v201 = vrot.slane %v192, %v200
    %v202 = vlaneseq
    %v203 = vshrl.u32 %v202, 7
    %v204 = vsub.s32 2, %v203
    %v205 = vrot.slane %v192, %v204
    %v206 = vlaneseq
    %v207 = vshrl.u32 %v206, 7
    %v208 = vsub.s32 3, %v207
    %v209 = vrot.slane %v192, %v208
    %v214 = vmul.f32 %v190, %v197
    %v215 = vmul.f32 %v189, %v201
    %v216 = vmul.f32 %v188, %v205
    %v217 = vmul.f32 %v187, %v209
    %218 = vst [vmem:[#allocation2 + $0x20] sm:$0xf] %v214
    %219 = vst [vmem:[#allocation2 + $0x28] sm:$0xf] %v215
    %220 = vst [vmem:[#allocation2 + $0x30] sm:$0xf] %v216
    %221 = vst [vmem:[#allocation2 + $0x38] sm:$0xf] %v217
    %222 = vrot.lane.b32.xlu0 %v67, 1
    %v223 = vpop.permute.xlu0 %222
    %224 = vrot.lane.b32.xlu0 %v68, 1
    %v225 = vpop.permute.xlu0 %224
    %226 = vrot.lane.b32.xlu0 %v73, 1
    %v227 = vpop.permute.xlu0 %226
    %228 = vrot.lane.b32.xlu0 %v74, 1
    %v229 = vpop.permute.xlu0 %228
    %vm230 = vcmp.lt.s32.totalorder %v86, 1
    %v231 = vsel %vm230, %v227, %v229
    %v232 = vsel %vm230, %v225, %v227
    %v233 = vsel %vm230, %v223, %v225
    %v234 = vsel %vm230, %v229, %v223
    %s235 = scalar_lea.vmem [#allocation4], 3
    %v236 = vld [vmem:[%s235] ss:$8 sm:$0xf]
    %v238 = vlaneseq
    %v239 = vshrl.u32 %v238, 7
    %v240 = vsub.s32 0, %v239
    %v241 = vrot.slane %v236, %v240
    %v242 = vlaneseq
    %v243 = vshrl.u32 %v242, 7
    %v244 = vsub.s32 1, %v243
    %v245 = vrot.slane %v236, %v244
    %v246 = vlaneseq
    %v247 = vshrl.u32 %v246, 7
    %v248 = vsub.s32 2, %v247
    %v249 = vrot.slane %v236, %v248
    %v250 = vlaneseq
    %v251 = vshrl.u32 %v250, 7
    %v252 = vsub.s32 3, %v251
    %v253 = vrot.slane %v236, %v252
    %v258 = vmul.f32 %v234, %v241
    %v259 = vmul.f32 %v233, %v245
    %v260 = vmul.f32 %v232, %v249
    %v261 = vmul.f32 %v231, %v253
    %v266 = vrot.slane %v258, 4
    %v267 = vrot.slane %v259, 4
    %v268 = vrot.slane %v260, 4
    %v269 = vrot.slane %v261, 4
    %274 = vst [vmem:[#allocation2 + $0x20] sm:$0xf0] %v266
    %275 = vst [vmem:[#allocation2 + $0x28] sm:$0xf0] %v267
    %276 = vst [vmem:[#allocation2 + $0x30] sm:$0xf0] %v268
    %277 = vst [vmem:[#allocation2 + $0x38] sm:$0xf0] %v269
    %278 = vst [vmem:[#allocation2 + $0x40] sm:$0xf] %v67
    %279 = vst [vmem:[#allocation2 + $0x48] sm:$0xf] %v68
    %280 = vst [vmem:[#allocation2 + $0x50] sm:$0xf] %v73
    %281 = vst [vmem:[#allocation2 + $0x58] sm:$0xf] %v74
    %282 = vrot.lane.b32.xlu0 %v67, 127
    %v283 = vpop.permute.xlu0 %282
    %284 = vrot.lane.b32.xlu0 %v68, 127
    %v285 = vpop.permute.xlu0 %284
    %286 = vrot.lane.b32.xlu0 %v73, 127
    %v287 = vpop.permute.xlu0 %286
    %288 = vrot.lane.b32.xlu0 %v74, 127
    %v289 = vpop.permute.xlu0 %288
    %vm290 = vcmp.lt.s32.totalorder %v86, 127
    %v291 = vsel %vm290, %v287, %v289
    %v292 = vsel %vm290, %v285, %v287
    %v293 = vsel %vm290, %v283, %v285
    %v294 = vsel %vm290, %v289, %v283
    %s295 = scalar_lea.vmem [#allocation4], 5
    %v296 = vld [vmem:[%s295] ss:$8 sm:$0xf]
    %v298 = vlaneseq
    %v299 = vshrl.u32 %v298, 7
    %v300 = vsub.s32 0, %v299
    %v301 = vrot.slane %v296, %v300
    %v302 = vlaneseq
    %v303 = vshrl.u32 %v302, 7
    %v304 = vsub.s32 1, %v303
    %v305 = vrot.slane %v296, %v304
    %v306 = vlaneseq
    %v307 = vshrl.u32 %v306, 7
    %v308 = vsub.s32 2, %v307
    %v309 = vrot.slane %v296, %v308
    %v310 = vlaneseq
    %v311 = vshrl.u32 %v310, 7
    %v312 = vsub.s32 3, %v311
    %v313 = vrot.slane %v296, %v312
    %v318 = vmul.f32 %v293, %v301
    %v319 = vmul.f32 %v292, %v305
    %v320 = vmul.f32 %v291, %v309
    %v321 = vmul.f32 %v294, %v313
    %v326 = vrot.slane %v318, 4
    %v327 = vrot.slane %v319, 4
    %v328 = vrot.slane %v320, 4
    %v329 = vrot.slane %v321, 4
    %334 = vst [vmem:[#allocation2 + $0x40] sm:$0xf0] %v326
    %335 = vst [vmem:[#allocation2 + $0x48] sm:$0xf0] %v327
    %336 = vst [vmem:[#allocation2 + $0x50] sm:$0xf0] %v328
    %337 = vst [vmem:[#allocation2 + $0x58] sm:$0xf0] %v329
    %338 = vrot.lane.b32.xlu0 %v67, 113
    %v339 = vpop.permute.xlu0 %338
    %340 = vrot.lane.b32.xlu0 %v68, 113
    %v341 = vpop.permute.xlu0 %340
    %342 = vrot.lane.b32.xlu0 %v73, 113
    %v343 = vpop.permute.xlu0 %342
    %344 = vrot.lane.b32.xlu0 %v74, 113
    %v345 = vpop.permute.xlu0 %344
    %vm346 = vcmp.lt.s32.totalorder %v86, 113
    %v347 = vsel %vm346, %v343, %v345
    %v348 = vsel %vm346, %v341, %v343
    %v349 = vsel %vm346, %v339, %v341
    %v350 = vsel %vm346, %v345, %v339
    %s351 = scalar_lea.vmem [#allocation4], 6
    %v352 = vld [vmem:[%s351] ss:$8 sm:$0xf]
    %v354 = vlaneseq
    %v355 = vshrl.u32 %v354, 7
    %v356 = vsub.s32 0, %v355
    %v357 = vrot.slane %v352, %v356
    %v358 = vlaneseq
    %v359 = vshrl.u32 %v358, 7
    %v360 = vsub.s32 1, %v359
    %v361 = vrot.slane %v352, %v360
    %v362 = vlaneseq
    %v363 = vshrl.u32 %v362, 7
    %v364 = vsub.s32 2, %v363
    %v365 = vrot.slane %v352, %v364
    %v366 = vlaneseq
    %v367 = vshrl.u32 %v366, 7
    %v368 = vsub.s32 3, %v367
    %v369 = vrot.slane %v352, %v368
    %v374 = vmul.f32 %v349, %v357
    %v375 = vmul.f32 %v348, %v361
    %v376 = vmul.f32 %v347, %v365
    %v377 = vmul.f32 %v350, %v369
    %378 = vst [vmem:[#allocation2 + $0x60] sm:$0xf] %v374
    %379 = vst [vmem:[#allocation2 + $0x68] sm:$0xf] %v375
    %380 = vst [vmem:[#allocation2 + $0x70] sm:$0xf] %v376
    %381 = vst [vmem:[#allocation2 + $0x78] sm:$0xf] %v377
    %382 = vrot.lane.b32.xlu0 %v67, 112
    %v383 = vpop.permute.xlu0 %382
    %384 = vrot.lane.b32.xlu0 %v68, 112
    %v385 = vpop.permute.xlu0 %384
    %386 = vrot.lane.b32.xlu0 %v73, 112
    %v387 = vpop.permute.xlu0 %386
    %388 = vrot.lane.b32.xlu0 %v74, 112
    %v389 = vpop.permute.xlu0 %388
    %vm390 = vcmp.lt.s32.totalorder %v86, 112
    %v391 = vsel %vm390, %v387, %v389
    %v392 = vsel %vm390, %v385, %v387
    %v393 = vsel %vm390, %v383, %v385
    %v394 = vsel %vm390, %v389, %v383
    %s395 = scalar_lea.vmem [#allocation4], 7
    %v396 = vld [vmem:[%s395] ss:$8 sm:$0xf]
    %v398 = vlaneseq
    %v399 = vshrl.u32 %v398, 7
    %v400 = vsub.s32 0, %v399
    %v401 = vrot.slane %v396, %v400
    %v402 = vlaneseq
    %v403 = vshrl.u32 %v402, 7
    %v404 = vsub.s32 1, %v403
    %v405 = vrot.slane %v396, %v404
    %v406 = vlaneseq
    %v407 = vshrl.u32 %v406, 7
    %v408 = vsub.s32 2, %v407
    %v409 = vrot.slane %v396, %v408
    %v410 = vlaneseq
    %v411 = vshrl.u32 %v410, 7
    %v412 = vsub.s32 3, %v411
    %v413 = vrot.slane %v396, %v412
    %v418 = vmul.f32 %v393, %v401
    %v419 = vmul.f32 %v392, %v405
    %v420 = vmul.f32 %v391, %v409
    %v421 = vmul.f32 %v394, %v413
    %v426 = vrot.slane %v418, 4
    %v427 = vrot.slane %v419, 4
    %v428 = vrot.slane %v420, 4
    %v429 = vrot.slane %v421, 4
    %434 = vst [vmem:[#allocation2 + $0x60] sm:$0xf0] %v426
    %435 = vst [vmem:[#allocation2 + $0x68] sm:$0xf0] %v427
    %436 = vst [vmem:[#allocation2 + $0x70] sm:$0xf0] %v428
    %437 = vst [vmem:[#allocation2 + $0x78] sm:$0xf0] %v429
    %438 = vrot.lane.b32.xlu0 %v67, 111
    %v439 = vpop.permute.xlu0 %438
    %440 = vrot.lane.b32.xlu0 %v68, 111
    %v441 = vpop.permute.xlu0 %440
    %442 = vrot.lane.b32.xlu0 %v73, 111
    %v443 = vpop.permute.xlu0 %442
    %444 = vrot.lane.b32.xlu0 %v74, 111
    %v445 = vpop.permute.xlu0 %444
    %vm446 = vcmp.lt.s32.totalorder %v86, 111
    %v447 = vsel %vm446, %v443, %v445
    %v448 = vsel %vm446, %v441, %v443
    %v449 = vsel %vm446, %v439, %v441
    %v450 = vsel %vm446, %v445, %v439
    %s451 = scalar_lea.vmem [#allocation4], 32
    %v452 = vld [vmem:[%s451] ss:$8 sm:$0xf]
    %v454 = vlaneseq
    %v455 = vshrl.u32 %v454, 7
    %v456 = vsub.s32 0, %v455
    %v457 = vrot.slane %v452, %v456
    %v458 = vlaneseq
    %v459 = vshrl.u32 %v458, 7
    %v460 = vsub.s32 1, %v459
    %v461 = vrot.slane %v452, %v460
    %v462 = vlaneseq
    %v463 = vshrl.u32 %v462, 7
    %v464 = vsub.s32 2, %v463
    %v465 = vrot.slane %v452, %v464
    %v466 = vlaneseq
    %v467 = vshrl.u32 %v466, 7
    %v468 = vsub.s32 3, %v467
    %v469 = vrot.slane %v452, %v468
    %v474 = vmul.f32 %v449, %v457
    %v475 = vmul.f32 %v448, %v461
    %v476 = vmul.f32 %v447, %v465
    %v477 = vmul.f32 %v450, %v469
    %478 = vst [vmem:[#allocation2 + $0x80] sm:$0xf] %v474
    %479 = vst [vmem:[#allocation2 + $0x88] sm:$0xf] %v475
    %480 = vst [vmem:[#allocation2 + $0x90] sm:$0xf] %v476
    %481 = vst [vmem:[#allocation2 + $0x98] sm:$0xf] %v477
    %v482 = vld [vmem:[%s3] sm:$0xff]
    %v483 = vld [vmem:[#allocation2] sm:$0xff]
    %v484 = vld [vmem:[#allocation2 + $0x8] sm:$0xff]
    %v485 = vld [vmem:[#allocation2 + $0x10] sm:$0xff]
    %v486 = vld [vmem:[#allocation2 + $0x18] sm:$0xff]
    %v487 = vld [vmem:[#allocation2 + $0x20] sm:$0xff]
    %v488 = vld [vmem:[#allocation2 + $0x28] sm:$0xff]
    %v489 = vld [vmem:[#allocation2 + $0x30] sm:$0xff]
    %v490 = vld [vmem:[#allocation2 + $0x38] sm:$0xff]
    %v491 = vld [vmem:[#allocation2 + $0x40] sm:$0xff]
    %v492 = vld [vmem:[#allocation2 + $0x48] sm:$0xff]
    %v493 = vld [vmem:[#allocation2 + $0x50] sm:$0xff]
    %v494 = vld [vmem:[#allocation2 + $0x58] sm:$0xff]
    %v495 = vld [vmem:[#allocation2 + $0x60] sm:$0xff]
    %v496 = vld [vmem:[#allocation2 + $0x68] sm:$0xff]
    %v497 = vld [vmem:[#allocation2 + $0x70] sm:$0xff]
    %v498 = vld [vmem:[#allocation2 + $0x78] sm:$0xff]
    %v499 = vld [vmem:[#allocation2 + $0x80] sm:$0xf]
    %v500 = vld [vmem:[#allocation2 + $0x88] sm:$0xf]
    %v501 = vld [vmem:[#allocation2 + $0x90] sm:$0xf]
    %v502 = vld [vmem:[#allocation2 + $0x98] sm:$0xf]
    %v503 = vld [vmem:[%s4] sm:$0xff]
    %v504 = vld [vmem:[%s5] sm:$0xff]
    %v505 = vld [vmem:[%s6] sm:$0xff]
    %507 = vset.pattern.permute.xlu0 0
    %508 = vperm.xlu0 %507, %v503
    %v509 = vpop.permute.xlu0 %508
    %vm511 = vcmask 293888
    %v513 = vsel %vm511, %v482, 0
    %vm515 = vcmask 1043456
    %v517 = vsel %vm515, %v499, 0
    %v520 = vsel %vm515, %v500, 0
    %v523 = vsel %vm515, %v501, 0
    %v526 = vsel %vm515, %v502, 0
    %528 = vmatprep.subr.mxu0 %v484
    %529 = vmatpush1.msra.mxu0 %v483
    %530 = vmatprep.subr.mxu0 %v488
    %531 = vmatpush1.msra.mxu0 %v487
    %532 = vmatprep.subr.mxu0 %v492
    %533 = vmatpush1.msra.mxu0 %v491
    %534 = vmatprep.subr.mxu0 %v496
    %535 = vmatpush1.msra.mxu0 %v495
    %536 = vmatprep.subr.mxu0 %v520
    %537 = vmatpush1.msra.mxu0 %v517
    %538 = vmatprep.subr.mxu0 0.0
    %539 = vmatpush1.msra.mxu0 0.0
    %540 = vmatprep.subr.mxu0 0.0
    %541 = vmatpush1.msra.mxu0 0.0
    %542 = vmatprep.subr.mxu0 0.0
    %543 = vmatpush1.msra.mxu0 0.0
    %544 = vmatprep.subr.mxu0 0.0
    %545 = vmatpush1.msra.mxu0 0.0
    %546 = vmatprep.subr.mxu0 0.0
    %547 = vmatpush1.msra.mxu0 0.0
    %548 = vmatprep.subr.mxu0 0.0
    %549 = vmatpush1.msra.mxu0 0.0
    %550 = vmatprep.subr.mxu0 0.0
    %551 = vmatpush1.msra.mxu0 0.0
    %552 = vmatprep.subr.mxu0 0.0
    %553 = vmatpush1.msra.mxu0 0.0
    %554 = vmatprep.subr.mxu0 0.0
    %555 = vmatpush1.msra.mxu0 0.0
    %556 = vmatprep.subr.mxu0 0.0
    %557 = vmatpush1.msra.mxu0 0.0
    %558 = vmatprep.subr.mxu0 0.0
    %559 = vmatpush1.msra.mxu0 0.0
    %560 = vmatprep.subr.mxu0 0.0
    %561 = vmatpush1.msra.mxu0 0.0
    %562 = vmatprep.subr.mxu0 0.0
    %563 = vmatpush1.msra.mxu0 0.0
    %564 = vmatprep.subr.mxu0 0.0
    %565 = vmatpush1.msra.mxu0 0.0
    %566 = vmatprep.subr.mxu0 0.0
    %567 = vmatpush1.msra.mxu0 0.0
    %568 = vmatprep.subr.mxu0 0.0
    %569 = vmatpush1.msra.mxu0 0.0
    %570 = vmatprep.subr.mxu0 0.0
    %571 = vmatpush1.msra.mxu0 0.0
    %572 = vmatprep.subr.mxu0 0.0
    %573 = vmatpush1.msra.mxu0 0.0
    %574 = vmatprep.subr.mxu0 0.0
    %575 = vmatpush1.msra.mxu0 0.0
    %576 = vmatprep.subr.mxu0 0.0
    %577 = vmatpush1.msra.mxu0 0.0
    %578 = vmatprep.subr.mxu0 0.0
    %579 = vmatpush1.msra.mxu0 0.0
    %580 = vmatprep.subr.mxu0 0.0
    %581 = vmatpush1.msra.mxu0 0.0
    %582 = vmatprep.subr.mxu0 0.0
    %583 = vmatpush1.msra.mxu0 0.0
    %584 = vmatprep.subr.mxu0 0.0
    %585 = vmatpush1.msra.mxu0 0.0
    %586 = vmatprep.subr.mxu0 0.0
    %587 = vmatpush1.msra.mxu0 0.0
    %588 = vmatprep.subr.mxu0 0.0
    %589 = vmatpush1.msra.mxu0 0.0
    %590 = vmatprep.subr.mxu0 0.0
    %591 = vmatpush1.msra.mxu0 0.0
    %592 = vmatprep.mubr.f32.mxu0 0.0
    %593 = vmatmul.mubr.f32.gmra.mrb[0].mxu0 %v513
    %v594 = vpop.f32.mrb[0].mxu0
    %v595 = vadd.f32 %v509, %v594
    %v596 = vpop.f32.mrb[0].mxu0
    %v597 = vadd.f32 %v509, %v596
    %598 = vdwg.mxu0
    %599 = vmatprep.subr.mxu0 %v486
    %600 = vmatpush1.msra.mxu0 %v485
    %601 = vmatprep.subr.mxu0 %v490
    %602 = vmatpush1.msra.mxu0 %v489
    %603 = vmatprep.subr.mxu0 %v494
    %604 = vmatpush1.msra.mxu0 %v493
    %605 = vmatprep.subr.mxu0 %v498
    %606 = vmatpush1.msra.mxu0 %v497
    %607 = vmatprep.subr.mxu0 %v526
    %608 = vmatpush1.msra.mxu0 %v523
    %609 = vmatprep.subr.mxu0 0.0
    %610 = vmatpush1.msra.mxu0 0.0
    %611 = vmatprep.subr.mxu0 0.0
    %612 = vmatpush1.msra.mxu0 0.0
    %613 = vmatprep.subr.mxu0 0.0
    %614 = vmatpush1.msra.mxu0 0.0
    %615 = vmatprep.subr.mxu0 0.0
    %616 = vmatpush1.msra.mxu0 0.0
    %617 = vmatprep.subr.mxu0 0.0
    %618 = vmatpush1.msra.mxu0 0.0
    %619 = vmatprep.subr.mxu0 0.0
    %620 = vmatpush1.msra.mxu0 0.0
    %621 = vmatprep.subr.mxu0 0.0
    %622 = vmatpush1.msra.mxu0 0.0
    %623 = vmatprep.subr.mxu0 0.0
    %624 = vmatpush1.msra.mxu0 0.0
    %625 = vmatprep.subr.mxu0 0.0
    %626 = vmatpush1.msra.mxu0 0.0
    %627 = vmatprep.subr.mxu0 0.0
    %628 = vmatpush1.msra.mxu0 0.0
    %629 = vmatprep.subr.mxu0 0.0
    %630 = vmatpush1.msra.mxu0 0.0
    %631 = vmatprep.subr.mxu0 0.0
    %632 = vmatpush1.msra.mxu0 0.0
    %633 = vmatprep.subr.mxu0 0.0
    %634 = vmatpush1.msra.mxu0 0.0
    %635 = vmatprep.subr.mxu0 0.0
    %636 = vmatpush1.msra.mxu0 0.0
    %637 = vmatprep.subr.mxu0 0.0
    %638 = vmatpush1.msra.mxu0 0.0
    %639 = vmatprep.subr.mxu0 0.0
    %640 = vmatpush1.msra.mxu0 0.0
    %641 = vmatprep.subr.mxu0 0.0
    %642 = vmatpush1.msra.mxu0 0.0
    %643 = vmatprep.subr.mxu0 0.0
    %644 = vmatpush1.msra.mxu0 0.0
    %645 = vmatprep.subr.mxu0 0.0
    %646 = vmatpush1.msra.mxu0 0.0
    %647 = vmatprep.subr.mxu0 0.0
    %648 = vmatpush1.msra.mxu0 0.0
    %649 = vmatprep.subr.mxu0 0.0
    %650 = vmatpush1.msra.mxu0 0.0
    %651 = vmatprep.subr.mxu0 0.0
    %652 = vmatpush1.msra.mxu0 0.0
    %653 = vmatprep.subr.mxu0 0.0
    %654 = vmatpush1.msra.mxu0 0.0
    %655 = vmatprep.subr.mxu0 0.0
    %656 = vmatpush1.msra.mxu0 0.0
    %657 = vmatprep.subr.mxu0 0.0
    %658 = vmatpush1.msra.mxu0 0.0
    %659 = vmatprep.subr.mxu0 0.0
    %660 = vmatpush1.msra.mxu0 0.0
    %661 = vmatprep.subr.mxu0 0.0
    %662 = vmatpush1.msra.mxu0 0.0
    %663 = vmatprep.mubr.f32.mxu0 0.0
    %664 = vmatmul.mubr.f32.gmra.mrb[0].mxu0 %v513
    %v665 = vpop.f32.mrb[0].mxu0
    %v666 = vadd.f32 %v509, %v665
    %v667 = vpop.f32.mrb[0].mxu0
    %v668 = vadd.f32 %v509, %v667
    %669 = vdwg.mxu0
    %v670 = vadd.f32 %v595, %v597
    %v671 = vadd.f32 %v670, %v666
    %v672 = vadd.f32 %v671, %v668
    %673 = vadd.xlane.f32.xlu0 %v672
    %v674 = vpop.xlane.xlu0 %673
    %v675 = vmul.f32 %v674, 0.001953125
    %v676 = vsub.f32 %v595, %v675
    %v677 = vsub.f32 %v597, %v675
    %v678 = vsub.f32 %v666, %v675
    %v679 = vsub.f32 %v668, %v675
    %v680 = vmul.f32 %v676, %v676
    %v681 = vmul.f32 %v677, %v677
    %v682 = vmul.f32 %v678, %v678
    %v683 = vmul.f32 %v679, %v679
    %v684 = vadd.f32 %v680, %v681
    %v685 = vadd.f32 %v684, %v682
    %v686 = vadd.f32 %v685, %v683
    %687 = vadd.xlane.f32.xlu0 %v686
    %v688 = vpop.xlane.xlu0 %687
    %v689 = vmul.f32 %v688, 0.001953125
    %v690 = vadd.f32 %v689, 1e-05
    %v691 = vrsqrt.pop %v690
    %v692 = vmul.f32 %v676, %v691
    %v693 = vmul.f32 %v677, %v691
    %v694 = vmul.f32 %v678, %v691
    %v695 = vmul.f32 %v679, %v691
    %697 = vset.pattern.permute.xlu0 0
    %698 = vperm.xlu0 %697, %v504
    %v699 = vpop.permute.xlu0 %698
    %v701 = vmul.f32 %v692, %v699
    %v702 = vmul.f32 %v693, %v699
    %v703 = vmul.f32 %v694, %v699
    %v704 = vmul.f32 %v695, %v699
    %706 = vset.pattern.permute.xlu0 0
    %707 = vperm.xlu0 %706, %v505
    %v708 = vpop.permute.xlu0 %707
    %v710 = vadd.f32 %v701, %v708
    %v711 = vadd.f32 %v702, %v708
    %v712 = vadd.f32 %v703, %v708
    %v713 = vadd.f32 %v704, %v708
    %v714 = vmul.f32 %v710, 0.5
    %v715 = vmul.f32 %v711, 0.5
    %v716 = vmul.f32 %v712, 0.5
    %v717 = vmul.f32 %v713, 0.5
    %v718 = vmul.f32 %v710, 0.70710677
    %v719 = vmul.f32 %v711, 0.70710677
    %v720 = vmul.f32 %v712, 0.70710677
    %v721 = vmul.f32 %v713, 0.70710677
    %v722 = vand.u32 2147483647, %v718
    %v723 = vand.u32 2147483647, %v719
    %v724 = vand.u32 2147483647, %v720
    %v725 = vand.u32 2147483647, %v721
    %v726 = vmul.f32 %v722, 0.3275911
    %v727 = vmul.f32 %v723, 0.3275911
    %v728 = vmul.f32 %v724, 0.3275911
    %v729 = vmul.f32 %v725, 0.3275911
    %v730 = vadd.f32 %v726, 1.0
    %v731 = vadd.f32 %v727, 1.0
    %v732 = vadd.f32 %v728, 1.0
    %v733 = vadd.f32 %v729, 1.0
    %v734 = vrcp.pop %v730
    %v735 = vmul.f32 1.0, %v734
    %v736 = vrcp.pop %v731
    %v737 = vmul.f32 1.0, %v736
    %v738 = vrcp.pop %v732
    %v739 = vmul.f32 1.0, %v738
    %v740 = vrcp.pop %v733
    %v741 = vmul.f32 1.0, %v740
    %v742 = vmul.f32 %v735, 1.0614054
    %v743 = vmul.f32 %v737, 1.0614054
    %v744 = vmul.f32 %v739, 1.0614054
    %v745 = vmul.f32 %v741, 1.0614054
    %v746 = vadd.f32 %v742, -1.4531521
    %v747 = vadd.f32 %v743, -1.4531521
    %v748 = vadd.f32 %v744, -1.4531521
    %v749 = vadd.f32 %v745, -1.4531521
    %v750 = vmul.f32 %v746, %v735
    %v751 = vmul.f32 %v747, %v737
    %v752 = vmul.f32 %v748, %v739
    %v753 = vmul.f32 %v749, %v741
    %v754 = vadd.f32 %v750, 1.4214138
    %v755 = vadd.f32 %v751, 1.4214138
    %v756 = vadd.f32 %v752, 1.4214138
    %v757 = vadd.f32 %v753, 1.4214138
    %v758 = vmul.f32 %v754, %v735
    %v759 = vmul.f32 %v755, %v737
    %v760 = vmul.f32 %v756, %v739
    %v761 = vmul.f32 %v757, %v741
    %v762 = vadd.f32 %v758, -0.28449672
    %v763 = vadd.f32 %v759, -0.28449672
    %v764 = vadd.f32 %v760, -0.28449672
    %v765 = vadd.f32 %v761, -0.28449672
    %v766 = vmul.f32 %v762, %v735
    %v767 = vmul.f32 %v763, %v737
    %v768 = vmul.f32 %v764, %v739
    %v769 = vmul.f32 %v765, %v741
    %v770 = vadd.f32 %v766, 0.2548296
    %v771 = vadd.f32 %v767, 0.2548296
    %v772 = vadd.f32 %v768, 0.2548296
    %v773 = vadd.f32 %v769, 0.2548296
    %v774 = vmul.f32 %v770, %v735
    %v775 = vmul.f32 %v771, %v737
    %v776 = vmul.f32 %v772, %v739
    %v777 = vmul.f32 %v773, %v741
    %v778 = vsub.f32 0.0, %v722
    %v779 = vsub.f32 0.0, %v723
    %v780 = vsub.f32 0.0, %v724
    %v781 = vsub.f32 0.0, %v725
    %v782 = vmul.f32 %v778, %v722
    %v783 = vmul.f32 %v779, %v723
    %v784 = vmul.f32 %v780, %v724
    %v785 = vmul.f32 %v781, %v725
    %v786 = vmul.f32 %v782, 1.442695
    %v787 = vpow.pop %v786
    %v788 = vmul.f32 %v783, 1.442695
    %v789 = vpow.pop %v788
    %v790 = vmul.f32 %v784, 1.442695
    %v791 = vpow.pop %v790
    %v792 = vmul.f32 %v785, 1.442695
    %v793 = vpow.pop %v792
    %v794 = vmul.f32 %v774, %v787
    %v795 = vmul.f32 %v775, %v789
    %v796 = vmul.f32 %v776, %v791
    %v797 = vmul.f32 %v777, %v793
    %v798 = vsub.f32 1.0, %v794
    %v799 = vsub.f32 1.0, %v795
    %v800 = vsub.f32 1.0, %v796
    %v801 = vsub.f32 1.0, %v797
    %vm802 = vcmp.lt.f32.partialorder %v718, 0.0
    %vm803 = vcmp.lt.f32.partialorder %v719, 0.0
    %vm804 = vcmp.lt.f32.partialorder %v720, 0.0
    %vm805 = vcmp.lt.f32.partialorder %v721, 0.0
    %v806 = vsub.f32 0.0, %v798
    %v807 = vsub.f32 0.0, %v799
    %v808 = vsub.f32 0.0, %v800
    %v809 = vsub.f32 0.0, %v801
    %v810 = vsel %vm802, %v806, %v798
    %v811 = vsel %vm803, %v807, %v799
    %v812 = vsel %vm804, %v808, %v800
    %v813 = vsel %vm805, %v809, %v801
    %v814 = vadd.f32 %v810, 1.0
    %v815 = vadd.f32 %v811, 1.0
    %v816 = vadd.f32 %v812, 1.0
    %v817 = vadd.f32 %v813, 1.0
    %v818 = vmul.f32 %v714, %v814
    %v819 = vmul.f32 %v715, %v815
    %v820 = vmul.f32 %v716, %v816
    %v821 = vmul.f32 %v717, %v817
    %822 = vrot.lane.b32.xlu0 %v818, 17
    %v823 = vpop.permute.xlu0 %822
    %824 = vrot.lane.b32.xlu0 %v819, 17
    %v825 = vpop.permute.xlu0 %824
    %826 = vrot.lane.b32.xlu0 %v820, 17
    %v827 = vpop.permute.xlu0 %826
    %828 = vrot.lane.b32.xlu0 %v821, 17
    %v829 = vpop.permute.xlu0 %828
    %v830 = vsel %vm87, %v827, %v829
    %v831 = vsel %vm87, %v825, %v827
    %v832 = vsel %vm87, %v823, %v825
    %v833 = vsel %vm87, %v829, %v823
    %v834 = vld [vmem:[#allocation4] ss:$8 sm:$0xf]
    %v836 = vlaneseq
    %v837 = vshrl.u32 %v836, 7
    %v838 = vsub.s32 0, %v837
    %v839 = vrot.slane %v834, %v838
    %v840 = vlaneseq
    %v841 = vshrl.u32 %v840, 7
    %v842 = vsub.s32 1, %v841
    %v843 = vrot.slane %v834, %v842
    %v844 = vlaneseq
    %v845 = vshrl.u32 %v844, 7
    %v846 = vsub.s32 2, %v845
    %v847 = vrot.slane %v834, %v846
    %v848 = vlaneseq
    %v849 = vshrl.u32 %v848, 7
    %v850 = vsub.s32 3, %v849
    %v851 = vrot.slane %v834, %v850
    %v856 = vmul.f32 %v833, %v839
    %v857 = vmul.f32 %v832, %v843
    %v858 = vmul.f32 %v831, %v847
    %v859 = vmul.f32 %v830, %v851
    %860 = vst [vmem:[#allocation3] sm:$0xff] %v856
    %861 = vst [vmem:[#allocation3 + $0x8] sm:$0xff] %v857
    %862 = vst [vmem:[#allocation3 + $0x10] sm:$0xff] %v858
    %863 = vst [vmem:[#allocation3 + $0x18] sm:$0xff] %v859
    %864 = vrot.lane.b32.xlu0 %v818, 16
    %v865 = vpop.permute.xlu0 %864
    %866 = vrot.lane.b32.xlu0 %v819, 16
    %v867 = vpop.permute.xlu0 %866
    %868 = vrot.lane.b32.xlu0 %v820, 16
    %v869 = vpop.permute.xlu0 %868
    %870 = vrot.lane.b32.xlu0 %v821, 16
    %v871 = vpop.permute.xlu0 %870
    %v872 = vsel %vm130, %v869, %v871
    %v873 = vsel %vm130, %v867, %v869
    %v874 = vsel %vm130, %v865, %v867
    %v875 = vsel %vm130, %v871, %v865
    %v876 = vld [vmem:[%s135] ss:$8 sm:$0xf]
    %v878 = vlaneseq
    %v879 = vshrl.u32 %v878, 7
    %v880 = vsub.s32 0, %v879
    %v881 = vrot.slane %v876, %v880
    %v882 = vlaneseq
    %v883 = vshrl.u32 %v882, 7
    %v884 = vsub.s32 1, %v883
    %v885 = vrot.slane %v876, %v884
    %v886 = vlaneseq
    %v887 = vshrl.u32 %v886, 7
    %v888 = vsub.s32 2, %v887
    %v889 = vrot.slane %v876, %v888
    %v890 = vlaneseq
    %v891 = vshrl.u32 %v890, 7
    %v892 = vsub.s32 3, %v891
    %v893 = vrot.slane %v876, %v892
    %v898 = vmul.f32 %v875, %v881
    %v899 = vmul.f32 %v874, %v885
    %v900 = vmul.f32 %v873, %v889
    %v901 = vmul.f32 %v872, %v893
    %902 = vst [vmem:[#allocation3 + $0x20] sm:$0xff] %v898
    %903 = vst [vmem:[#allocation3 + $0x28] sm:$0xff] %v899
    %904 = vst [vmem:[#allocation3 + $0x30] sm:$0xff] %v900
    %905 = vst [vmem:[#allocation3 + $0x38] sm:$0xff] %v901
    %906 = vrot.lane.b32.xlu0 %v818, 15
    %v907 = vpop.permute.xlu0 %906
    %908 = vrot.lane.b32.xlu0 %v819, 15
    %v909 = vpop.permute.xlu0 %908
    %910 = vrot.lane.b32.xlu0 %v820, 15
    %v911 = vpop.permute.xlu0 %910
    %912 = vrot.lane.b32.xlu0 %v821, 15
    %v913 = vpop.permute.xlu0 %912
    %v914 = vsel %vm186, %v911, %v913
    %v915 = vsel %vm186, %v909, %v911
    %v916 = vsel %vm186, %v907, %v909
    %v917 = vsel %vm186, %v913, %v907
    %v918 = vld [vmem:[%s191] ss:$8 sm:$0xf]
    %v920 = vlaneseq
    %v921 = vshrl.u32 %v920, 7
    %v922 = vsub.s32 0, %v921
    %v923 = vrot.slane %v918, %v922
    %v924 = vlaneseq
    %v925 = vshrl.u32 %v924, 7
    %v926 = vsub.s32 1, %v925
    %v927 = vrot.slane %v918, %v926
    %v928 = vlaneseq
    %v929 = vshrl.u32 %v928, 7
    %v930 = vsub.s32 2, %v929
    %v931 = vrot.slane %v918, %v930
    %v932 = vlaneseq
    %v933 = vshrl.u32 %v932, 7
    %v934 = vsub.s32 3, %v933
    %v935 = vrot.slane %v918, %v934
    %v940 = vmul.f32 %v917, %v923
    %v941 = vmul.f32 %v916, %v927
    %v942 = vmul.f32 %v915, %v931
    %v943 = vmul.f32 %v914, %v935
    %944 = vst [vmem:[#allocation3 + $0x40] sm:$0xff] %v940
    %945 = vst [vmem:[#allocation3 + $0x48] sm:$0xff] %v941
    %946 = vst [vmem:[#allocation3 + $0x50] sm:$0xff] %v942
    %947 = vst [vmem:[#allocation3 + $0x58] sm:$0xff] %v943
    %948 = vrot.lane.b32.xlu0 %v818, 1
    %v949 = vpop.permute.xlu0 %948
    %950 = vrot.lane.b32.xlu0 %v819, 1
    %v951 = vpop.permute.xlu0 %950
    %952 = vrot.lane.b32.xlu0 %v820, 1
    %v953 = vpop.permute.xlu0 %952
    %954 = vrot.lane.b32.xlu0 %v821, 1
    %v955 = vpop.permute.xlu0 %954
    %v956 = vsel %vm230, %v953, %v955
    %v957 = vsel %vm230, %v951, %v953
    %v958 = vsel %vm230, %v949, %v951
    %v959 = vsel %vm230, %v955, %v949
    %v960 = vld [vmem:[%s235] ss:$8 sm:$0xf]
    %v962 = vlaneseq
    %v963 = vshrl.u32 %v962, 7
    %v964 = vsub.s32 0, %v963
    %v965 = vrot.slane %v960, %v964
    %v966 = vlaneseq
    %v967 = vshrl.u32 %v966, 7
    %v968 = vsub.s32 1, %v967
    %v969 = vrot.slane %v960, %v968
    %v970 = vlaneseq
    %v971 = vshrl.u32 %v970, 7
    %v972 = vsub.s32 2, %v971
    %v973 = vrot.slane %v960, %v972
    %v974 = vlaneseq
    %v975 = vshrl.u32 %v974, 7
    %v976 = vsub.s32 3, %v975
    %v977 = vrot.slane %v960, %v976
    %v982 = vmul.f32 %v959, %v965
    %v983 = vmul.f32 %v958, %v969
    %v984 = vmul.f32 %v957, %v973
    %v985 = vmul.f32 %v956, %v977
    %986 = vst [vmem:[#allocation3 + $0x60] sm:$0xff] %v982
    %987 = vst [vmem:[#allocation3 + $0x68] sm:$0xff] %v983
    %988 = vst [vmem:[#allocation3 + $0x70] sm:$0xff] %v984
    %989 = vst [vmem:[#allocation3 + $0x78] sm:$0xff] %v985
    %990 = vst [vmem:[#allocation3 + $0x80] sm:$0xff] %v818
    %991 = vst [vmem:[#allocation3 + $0x88] sm:$0xff] %v819
    %992 = vst [vmem:[#allocation3 + $0x90] sm:$0xff] %v820
    %993 = vst [vmem:[#allocation3 + $0x98] sm:$0xff] %v821
    %994 = vrot.lane.b32.xlu0 %v818, 127
    %v995 = vpop.permute.xlu0 %994
    %996 = vrot.lane.b32.xlu0 %v819, 127
    %v997 = vpop.permute.xlu0 %996
    %998 = vrot.lane.b32.xlu0 %v820, 127
    %v999 = vpop.permute.xlu0 %998
    %1000 = vrot.lane.b32.xlu0 %v821, 127
    %v1001 = vpop.permute.xlu0 %1000
    %v1002 = vsel %vm290, %v999, %v1001
    %v1003 = vsel %vm290, %v997, %v999
    %v1004 = vsel %vm290, %v995, %v997
    %v1005 = vsel %vm290, %v1001, %v995
    %v1006 = vld [vmem:[%s295] ss:$8 sm:$0xf]
    %v1008 = vlaneseq
    %v1009 = vshrl.u32 %v1008, 7
    %v1010 = vsub.s32 0, %v1009
    %v1011 = vrot.slane %v1006, %v1010
    %v1012 = vlaneseq
    %v1013 = vshrl.u32 %v1012, 7
    %v1014 = vsub.s32 1, %v1013
    %v1015 = vrot.slane %v1006, %v1014
    %v1016 = vlaneseq
    %v1017 = vshrl.u32 %v1016, 7
    %v1018 = vsub.s32 2, %v1017
    %v1019 = vrot.slane %v1006, %v1018
    %v1020 = vlaneseq
    %v1021 = vshrl.u32 %v1020, 7
    %v1022 = vsub.s32 3, %v1021
    %v1023 = vrot.slane %v1006, %v1022
    %v1028 = vmul.f32 %v1004, %v1011
    %v1029 = vmul.f32 %v1003, %v1015
    %v1030 = vmul.f32 %v1002, %v1019
    %v1031 = vmul.f32 %v1005, %v1023
    %1032 = vst [vmem:[#allocation3 + $0xa0] sm:$0xff] %v1028
    %1033 = vst [vmem:[#allocation3 + $0xa8] sm:$0xff] %v1029
    %1034 = vst [vmem:[#allocation3 + $0xb0] sm:$0xff] %v1030
    %1035 = vst [vmem:[#allocation3 + $0xb8] sm:$0xff] %v1031
    %1036 = vrot.lane.b32.xlu0 %v818, 113
    %v1037 = vpop.permute.xlu0 %1036
    %1038 = vrot.lane.b32.xlu0 %v819, 113
    %v1039 = vpop.permute.xlu0 %1038
    %1040 = vrot.lane.b32.xlu0 %v820, 113
    %v1041 = vpop.permute.xlu0 %1040
    %1042 = vrot.lane.b32.xlu0 %v821, 113
    %v1043 = vpop.permute.xlu0 %1042
    %v1044 = vsel %vm346, %v1041, %v1043
    %v1045 = vsel %vm346, %v1039, %v1041
    %v1046 = vsel %vm346, %v1037, %v1039
    %v1047 = vsel %vm346, %v1043, %v1037
    %v1048 = vld [vmem:[%s351] ss:$8 sm:$0xf]
    %v1050 = vlaneseq
    %v1051 = vshrl.u32 %v1050, 7
    %v1052 = vsub.s32 0, %v1051
    %v1053 = vrot.slane %v1048, %v1052
    %v1054 = vlaneseq
    %v1055 = vshrl.u32 %v1054, 7
    %v1056 = vsub.s32 1, %v1055
    %v1057 = vrot.slane %v1048, %v1056
    %v1058 = vlaneseq
    %v1059 = vshrl.u32 %v1058, 7
    %v1060 = vsub.s32 2, %v1059
    %v1061 = vrot.slane %v1048, %v1060
    %v1062 = vlaneseq
    %v1063 = vshrl.u32 %v1062, 7
    %v1064 = vsub.s32 3, %v1063
    %v1065 = vrot.slane %v1048, %v1064
    %v1070 = vmul.f32 %v1046, %v1053
    %v1071 = vmul.f32 %v1045, %v1057
    %v1072 = vmul.f32 %v1044, %v1061
    %v1073 = vmul.f32 %v1047, %v1065
    %1074 = vst [vmem:[#allocation3 + $0xc0] sm:$0xff] %v1070
    %1075 = vst [vmem:[#allocation3 + $0xc8] sm:$0xff] %v1071
    %1076 = vst [vmem:[#allocation3 + $0xd0] sm:$0xff] %v1072
    %1077 = vst [vmem:[#allocation3 + $0xd8] sm:$0xff] %v1073
    %1078 = vrot.lane.b32.xlu0 %v818, 112
    %v1079 = vpop.permute.xlu0 %1078
    %1080 = vrot.lane.b32.xlu0 %v819, 112
    %v1081 = vpop.permute.xlu0 %1080
    %1082 = vrot.lane.b32.xlu0 %v820, 112
    %v1083 = vpop.permute.xlu0 %1082
    %1084 = vrot.lane.b32.xlu0 %v821, 112
    %v1085 = vpop.permute.xlu0 %1084
    %v1086 = vsel %vm390, %v1083, %v1085
    %v1087 = vsel %vm390, %v1081, %v1083
    %v1088 = vsel %vm390, %v1079, %v1081
    %v1089 = vsel %vm390, %v1085, %v1079
    %v1090 = vld [vmem:[%s395] ss:$8 sm:$0xf]
    %v1092 = vlaneseq
    %v1093 = vshrl.u32 %v1092, 7
    %v1094 = vsub.s32 0, %v1093
    %v1095 = vrot.slane %v1090, %v1094
    %v1096 = vlaneseq
    %v1097 = vshrl.u32 %v1096, 7
    %v1098 = vsub.s32 1, %v1097
    %v1099 = vrot.slane %v1090, %v1098
    %v1100 = vlaneseq
    %v1101 = vshrl.u32 %v1100, 7
    %v1102 = vsub.s32 2, %v1101
    %v1103 = vrot.slane %v1090, %v1102
    %v1104 = vlaneseq
    %v1105 = vshrl.u32 %v1104, 7
    %v1106 = vsub.s32 3, %v1105
    %v1107 = vrot.slane %v1090, %v1106
    %v1112 = vmul.f32 %v1088, %v1095
    %v1113 = vmul.f32 %v1087, %v1099
    %v1114 = vmul.f32 %v1086, %v1103
    %v1115 = vmul.f32 %v1089, %v1107
    %1116 = vst [vmem:[#allocation3 + $0xe0] sm:$0xff] %v1112
    %1117 = vst [vmem:[#allocation3 + $0xe8] sm:$0xff] %v1113
    %1118 = vst [vmem:[#allocation3 + $0xf0] sm:$0xff] %v1114
    %1119 = vst [vmem:[#allocation3 + $0xf8] sm:$0xff] %v1115
    %1120 = vrot.lane.b32.xlu0 %v818, 111
    %v1121 = vpop.permute.xlu0 %1120
    %1122 = vrot.lane.b32.xlu0 %v819, 111
    %v1123 = vpop.permute.xlu0 %1122
    %1124 = vrot.lane.b32.xlu0 %v820, 111
    %v1125 = vpop.permute.xlu0 %1124
    %1126 = vrot.lane.b32.xlu0 %v821, 111
    %v1127 = vpop.permute.xlu0 %1126
    %v1128 = vsel %vm446, %v1125, %v1127
    %v1129 = vsel %vm446, %v1123, %v1125
    %v1130 = vsel %vm446, %v1121, %v1123
    %v1131 = vsel %vm446, %v1127, %v1121
    %v1132 = vld [vmem:[%s451] ss:$8 sm:$0xf]
    %v1134 = vlaneseq
    %v1135 = vshrl.u32 %v1134, 7
    %v1136 = vsub.s32 0, %v1135
    %v1137 = vrot.slane %v1132, %v1136
    %v1138 = vlaneseq
    %v1139 = vshrl.u32 %v1138, 7
    %v1140 = vsub.s32 1, %v1139
    %v1141 = vrot.slane %v1132, %v1140
    %v1142 = vlaneseq
    %v1143 = vshrl.u32 %v1142, 7
    %v1144 = vsub.s32 2, %v1143
    %v1145 = vrot.slane %v1132, %v1144
    %v1146 = vlaneseq
    %v1147 = vshrl.u32 %v1146, 7
    %v1148 = vsub.s32 3, %v1147
    %v1149 = vrot.slane %v1132, %v1148
    %v1154 = vmul.f32 %v1130, %v1137
    %v1155 = vmul.f32 %v1129, %v1141
    %v1156 = vmul.f32 %v1128, %v1145
    %v1157 = vmul.f32 %v1131, %v1149
    %1158 = vst [vmem:[#allocation3 + $0x100] sm:$0xff] %v1154
    %1159 = vst [vmem:[#allocation3 + $0x108] sm:$0xff] %v1155
    %1160 = vst [vmem:[#allocation3 + $0x110] sm:$0xff] %v1156
    %1161 = vst [vmem:[#allocation3 + $0x118] sm:$0xff] %v1157
    %v1162 = vld [vmem:[%s7] sm:$0xff]
    %v1163 = vld [vmem:[#allocation3] sm:$0xff]
    %v1164 = vld [vmem:[#allocation3 + $0x8] sm:$0xff]
    %v1165 = vld [vmem:[#allocation3 + $0x10] sm:$0xff]
    %v1166 = vld [vmem:[#allocation3 + $0x18] sm:$0xff]
    %v1167 = vld [vmem:[#allocation3 + $0x20] sm:$0xff]
    %v1168 = vld [vmem:[#allocation3 + $0x28] sm:$0xff]
    %v1169 = vld [vmem:[#allocation3 + $0x30] sm:$0xff]
    %v1170 = vld [vmem:[#allocation3 + $0x38] sm:$0xff]
    %v1171 = vld [vmem:[#allocation3 + $0x40] sm:$0xff]
    %v1172 = vld [vmem:[#allocation3 + $0x48] sm:$0xff]
    %v1173 = vld [vmem:[#allocation3 + $0x50] sm:$0xff]
    %v1174 = vld [vmem:[#allocation3 + $0x58] sm:$0xff]
    %v1175 = vld [vmem:[#allocation3 + $0x60] sm:$0xff]
    %v1176 = vld [vmem:[#allocation3 + $0x68] sm:$0xff]
    %v1177 = vld [vmem:[#allocation3 + $0x70] sm:$0xff]
    %v1178 = vld [vmem:[#allocation3 + $0x78] sm:$0xff]
    %v1179 = vld [vmem:[#allocation3 + $0x80] sm:$0xff]
    %v1180 = vld [vmem:[#allocation3 + $0x88] sm:$0xff]
    %v1181 = vld [vmem:[#allocation3 + $0x90] sm:$0xff]
    %v1182 = vld [vmem:[#allocation3 + $0x98] sm:$0xff]
    %v1183 = vld [vmem:[#allocation3 + $0xa0] sm:$0xff]
    %v1184 = vld [vmem:[#allocation3 + $0xa8] sm:$0xff]
    %v1185 = vld [vmem:[#allocation3 + $0xb0] sm:$0xff]
    %v1186 = vld [vmem:[#allocation3 + $0xb8] sm:$0xff]
    %v1187 = vld [vmem:[#allocation3 + $0xc0] sm:$0xff]
    %v1188 = vld [vmem:[#allocation3 + $0xc8] sm:$0xff]
    %v1189 = vld [vmem:[#allocation3 + $0xd0] sm:$0xff]
    %v1190 = vld [vmem:[#allocation3 + $0xd8] sm:$0xff]
    %v1191 = vld [vmem:[#allocation3 + $0xe0] sm:$0xff]
    %v1192 = vld [vmem:[#allocation3 + $0xe8] sm:$0xff]
    %v1193 = vld [vmem:[#allocation3 + $0xf0] sm:$0xff]
    %v1194 = vld [vmem:[#allocation3 + $0xf8] sm:$0xff]
    %v1195 = vld [vmem:[#allocation3 + $0x100] sm:$0xff]
    %v1196 = vld [vmem:[#allocation3 + $0x108] sm:$0xff]
    %v1197 = vld [vmem:[#allocation3 + $0x110] sm:$0xff]
    %v1198 = vld [vmem:[#allocation3 + $0x118] sm:$0xff]
    %v1199 = vld [vmem:[%s8] sm:$0xff]
    %v1200 = vld [vmem:[%s9] sm:$0xff]
    %v1201 = vld [vmem:[%s10] sm:$0xff]
    %1203 = vset.pattern.permute.xlu0 0
    %1204 = vperm.xlu0 %1203, %v1199
    %v1205 = vpop.permute.xlu0 %1204
    %vm1207 = vcmask 588800
    %v1209 = vsel %vm1207, %v1162, 0
    %1211 = vmatprep.subr.mxu0 %v1164
    %1212 = vmatpush1.msra.mxu0 %v1163
    %1213 = vmatprep.subr.mxu0 %v1168
    %1214 = vmatpush1.msra.mxu0 %v1167
    %1215 = vmatprep.subr.mxu0 %v1172
    %1216 = vmatpush1.msra.mxu0 %v1171
    %1217 = vmatprep.subr.mxu0 %v1176
    %1218 = vmatpush1.msra.mxu0 %v1175
    %1219 = vmatprep.subr.mxu0 %v1180
    %1220 = vmatpush1.msra.mxu0 %v1179
    %1221 = vmatprep.subr.mxu0 %v1184
    %1222 = vmatpush1.msra.mxu0 %v1183
    %1223 = vmatprep.subr.mxu0 %v1188
    %1224 = vmatpush1.msra.mxu0 %v1187
    %1225 = vmatprep.subr.mxu0 %v1192
    %1226 = vmatpush1.msra.mxu0 %v1191
    %1227 = vmatprep.subr.mxu0 %v1196
    %1228 = vmatpush1.msra.mxu0 %v1195
    %1229 = vmatprep.subr.mxu0 0.0
    %1230 = vmatpush1.msra.mxu0 0.0
    %1231 = vmatprep.subr.mxu0 0.0
    %1232 = vmatpush1.msra.mxu0 0.0
    %1233 = vmatprep.subr.mxu0 0.0
    %1234 = vmatpush1.msra.mxu0 0.0
    %1235 = vmatprep.subr.mxu0 0.0
    %1236 = vmatpush1.msra.mxu0 0.0
    %1237 = vmatprep.subr.mxu0 0.0
    %1238 = vmatpush1.msra.mxu0 0.0
    %1239 = vmatprep.subr.mxu0 0.0
    %1240 = vmatpush1.msra.mxu0 0.0
    %1241 = vmatprep.subr.mxu0 0.0
    %1242 = vmatpush1.msra.mxu0 0.0
    %1243 = vmatprep.subr.mxu0 0.0
    %1244 = vmatpush1.msra.mxu0 0.0
    %1245 = vmatprep.subr.mxu0 0.0
    %1246 = vmatpush1.msra.mxu0 0.0
    %1247 = vmatprep.subr.mxu0 0.0
    %1248 = vmatpush1.msra.mxu0 0.0
    %1249 = vmatprep.subr.mxu0 0.0
    %1250 = vmatpush1.msra.mxu0 0.0
    %1251 = vmatprep.subr.mxu0 0.0
    %1252 = vmatpush1.msra.mxu0 0.0
    %1253 = vmatprep.subr.mxu0 0.0
    %1254 = vmatpush1.msra.mxu0 0.0
    %1255 = vmatprep.subr.mxu0 0.0
    %1256 = vmatpush1.msra.mxu0 0.0
    %1257 = vmatprep.subr.mxu0 0.0
    %1258 = vmatpush1.msra.mxu0 0.0
    %1259 = vmatprep.subr.mxu0 0.0
    %1260 = vmatpush1.msra.mxu0 0.0
    %1261 = vmatprep.subr.mxu0 0.0
    %1262 = vmatpush1.msra.mxu0 0.0
    %1263 = vmatprep.subr.mxu0 0.0
    %1264 = vmatpush1.msra.mxu0 0.0
    %1265 = vmatprep.subr.mxu0 0.0
    %1266 = vmatpush1.msra.mxu0 0.0
    %1267 = vmatprep.subr.mxu0 0.0
    %1268 = vmatpush1.msra.mxu0 0.0
    %1269 = vmatprep.subr.mxu0 0.0
    %1270 = vmatpush1.msra.mxu0 0.0
    %1271 = vmatprep.subr.mxu0 0.0
    %1272 = vmatpush1.msra.mxu0 0.0
    %1273 = vmatprep.subr.mxu0 0.0
    %1274 = vmatpush1.msra.mxu0 0.0
    %1275 = vmatprep.mubr.f32.mxu0 0.0
    %1276 = vmatmul.mubr.f32.gmra.mrb[0].mxu0 %v1209
    %v1277 = vpop.f32.mrb[0].mxu0
    %v1278 = vadd.f32 %v1205, %v1277
    %v1279 = vpop.f32.mrb[0].mxu0
    %v1280 = vadd.f32 %v1205, %v1279
    %1281 = vdwg.mxu0
    %1282 = vmatprep.subr.mxu0 %v1166
    %1283 = vmatpush1.msra.mxu0 %v1165
    %1284 = vmatprep.subr.mxu0 %v1170
    %1285 = vmatpush1.msra.mxu0 %v1169
    %1286 = vmatprep.subr.mxu0 %v1174
    %1287 = vmatpush1.msra.mxu0 %v1173
    %1288 = vmatprep.subr.mxu0 %v1178
    %1289 = vmatpush1.msra.mxu0 %v1177
    %1290 = vmatprep.subr.mxu0 %v1182
    %1291 = vmatpush1.msra.mxu0 %v1181
    %1292 = vmatprep.subr.mxu0 %v1186
    %1293 = vmatpush1.msra.mxu0 %v1185
    %1294 = vmatprep.subr.mxu0 %v1190
    %1295 = vmatpush1.msra.mxu0 %v1189
    %1296 = vmatprep.subr.mxu0 %v1194
    %1297 = vmatpush1.msra.mxu0 %v1193
    %1298 = vmatprep.subr.mxu0 %v1198
    %1299 = vmatpush1.msra.mxu0 %v1197
    %1300 = vmatprep.subr.mxu0 0.0
    %1301 = vmatpush1.msra.mxu0 0.0
    %1302 = vmatprep.subr.mxu0 0.0
    %1303 = vmatpush1.msra.mxu0 0.0
    %1304 = vmatprep.subr.mxu0 0.0
    %1305 = vmatpush1.msra.mxu0 0.0
    %1306 = vmatprep.subr.mxu0 0.0
    %1307 = vmatpush1.msra.mxu0 0.0
    %1308 = vmatprep.subr.mxu0 0.0
    %1309 = vmatpush1.msra.mxu0 0.0
    %1310 = vmatprep.subr.mxu0 0.0
    %1311 = vmatpush1.msra.mxu0 0.0
    %1312 = vmatprep.subr.mxu0 0.0
    %1313 = vmatpush1.msra.mxu0 0.0
    %1314 = vmatprep.subr.mxu0 0.0
    %1315 = vmatpush1.msra.mxu0 0.0
    %1316 = vmatprep.subr.mxu0 0.0
    %1317 = vmatpush1.msra.mxu0 0.0
    %1318 = vmatprep.subr.mxu0 0.0
    %1319 = vmatpush1.msra.mxu0 0.0
    %1320 = vmatprep.subr.mxu0 0.0
    %1321 = vmatpush1.msra.mxu0 0.0
    %1322 = vmatprep.subr.mxu0 0.0
    %1323 = vmatpush1.msra.mxu0 0.0
    %1324 = vmatprep.subr.mxu0 0.0
    %1325 = vmatpush1.msra.mxu0 0.0
    %1326 = vmatprep.subr.mxu0 0.0
    %1327 = vmatpush1.msra.mxu0 0.0
    %1328 = vmatprep.subr.mxu0 0.0
    %1329 = vmatpush1.msra.mxu0 0.0
    %1330 = vmatprep.subr.mxu0 0.0
    %1331 = vmatpush1.msra.mxu0 0.0
    %1332 = vmatprep.subr.mxu0 0.0
    %1333 = vmatpush1.msra.mxu0 0.0
    %1334 = vmatprep.subr.mxu0 0.0
    %1335 = vmatpush1.msra.mxu0 0.0
    %1336 = vmatprep.subr.mxu0 0.0
    %1337 = vmatpush1.msra.mxu0 0.0
    %1338 = vmatprep.subr.mxu0 0.0
    %1339 = vmatpush1.msra.mxu0 0.0
    %1340 = vmatprep.subr.mxu0 0.0
    %1341 = vmatpush1.msra.mxu0 0.0
    %1342 = vmatprep.subr.mxu0 0.0
    %1343 = vmatpush1.msra.mxu0 0.0
    %1344 = vmatprep.subr.mxu0 0.0
    %1345 = vmatpush1.msra.mxu0 0.0
    %1346 = vmatprep.mubr.f32.mxu0 0.0
    %1347 = vmatmul.mubr.f32.gmra.mrb[0].mxu0 %v1209
    %v1348 = vpop.f32.mrb[0].mxu0
    %v1349 = vadd.f32 %v1205, %v1348
    %v1350 = vpop.f32.mrb[0].mxu0
    %v1351 = vadd.f32 %v1205, %v1350
    %1352 = vdwg.mxu0
    %v1353 = vadd.f32 %v1278, %v1280
    %v1354 = vadd.f32 %v1353, %v1349
    %v1355 = vadd.f32 %v1354, %v1351
    %1356 = vadd.xlane.f32.xlu0 %v1355
    %v1357 = vpop.xlane.xlu0 %1356
    %v1358 = vmul.f32 %v1357, 0.001953125
    %v1359 = vsub.f32 %v1278, %v1358
    %v1360 = vsub.f32 %v1280, %v1358
    %v1361 = vsub.f32 %v1349, %v1358
    %v1362 = vsub.f32 %v1351, %v1358
    %v1363 = vmul.f32 %v1359, %v1359
    %v1364 = vmul.f32 %v1360, %v1360
    %v1365 = vmul.f32 %v1361, %v1361
    %v1366 = vmul.f32 %v1362, %v1362
    %v1367 = vadd.f32 %v1363, %v1364
    %v1368 = vadd.f32 %v1367, %v1365
    %v1369 = vadd.f32 %v1368, %v1366
    %1370 = vadd.xlane.f32.xlu0 %v1369
    %v1371 = vpop.xlane.xlu0 %1370
    %v1372 = vmul.f32 %v1371, 0.001953125
    %v1373 = vadd.f32 %v1372, 1e-05
    %v1374 = vrsqrt.pop %v1373
    %v1375 = vmul.f32 %v1359, %v1374
    %v1376 = vmul.f32 %v1360, %v1374
    %v1377 = vmul.f32 %v1361, %v1374
    %v1378 = vmul.f32 %v1362, %v1374
    %1380 = vset.pattern.permute.xlu0 0
    %1381 = vperm.xlu0 %1380, %v1200
    %v1382 = vpop.permute.xlu0 %1381
    %v1384 = vmul.f32 %v1375, %v1382
    %v1385 = vmul.f32 %v1376, %v1382
    %v1386 = vmul.f32 %v1377, %v1382
    %v1387 = vmul.f32 %v1378, %v1382
    %1389 = vset.pattern.permute.xlu0 0
    %1390 = vperm.xlu0 %1389, %v1201
    %v1391 = vpop.permute.xlu0 %1390
    %v1393 = vadd.f32 %v1384, %v1391
    %v1394 = vadd.f32 %v1385, %v1391
    %v1395 = vadd.f32 %v1386, %v1391
    %v1396 = vadd.f32 %v1387, %v1391
    %v1397 = vmul.f32 %v1393, 0.5
    %v1398 = vmul.f32 %v1394, 0.5
    %v1399 = vmul.f32 %v1395, 0.5
    %v1400 = vmul.f32 %v1396, 0.5
    %v1401 = vmul.f32 %v1393, 0.70710677
    %v1402 = vmul.f32 %v1394, 0.70710677
    %v1403 = vmul.f32 %v1395, 0.70710677
    %v1404 = vmul.f32 %v1396, 0.70710677
    %v1405 = vand.u32 2147483647, %v1401
    %v1406 = vand.u32 2147483647, %v1402
    %v1407 = vand.u32 2147483647, %v1403
    %v1408 = vand.u32 2147483647, %v1404
    %v1409 = vmul.f32 %v1405, 0.3275911
    %v1410 = vmul.f32 %v1406, 0.3275911
    %v1411 = vmul.f32 %v1407, 0.3275911
    %v1412 = vmul.f32 %v1408, 0.3275911
    %v1413 = vadd.f32 %v1409, 1.0
    %v1414 = vadd.f32 %v1410, 1.0
    %v1415 = vadd.f32 %v1411, 1.0
    %v1416 = vadd.f32 %v1412, 1.0
    %v1417 = vrcp.pop %v1413
    %v1418 = vmul.f32 1.0, %v1417
    %v1419 = vrcp.pop %v1414
    %v1420 = vmul.f32 1.0, %v1419
    %v1421 = vrcp.pop %v1415
    %v1422 = vmul.f32 1.0, %v1421
    %v1423 = vrcp.pop %v1416
    %v1424 = vmul.f32 1.0, %v1423
    %v1425 = vmul.f32 %v1418, 1.0614054
    %v1426 = vmul.f32 %v1420, 1.0614054
    %v1427 = vmul.f32 %v1422, 1.0614054
    %v1428 = vmul.f32 %v1424, 1.0614054
    %v1429 = vadd.f32 %v1425, -1.4531521
    %v1430 = vadd.f32 %v1426, -1.4531521
    %v1431 = vadd.f32 %v1427, -1.4531521
    %v1432 = vadd.f32 %v1428, -1.4531521
    %v1433 = vmul.f32 %v1429, %v1418
    %v1434 = vmul.f32 %v1430, %v1420
    %v1435 = vmul.f32 %v1431, %v1422
    %v1436 = vmul.f32 %v1432, %v1424
    %v1437 = vadd.f32 %v1433, 1.4214138
    %v1438 = vadd.f32 %v1434, 1.4214138
    %v1439 = vadd.f32 %v1435, 1.4214138
    %v1440 = vadd.f32 %v1436, 1.4214138
    %v1441 = vmul.f32 %v1437, %v1418
    %v1442 = vmul.f32 %v1438, %v1420
    %v1443 = vmul.f32 %v1439, %v1422
    %v1444 = vmul.f32 %v1440, %v1424
    %v1445 = vadd.f32 %v1441, -0.28449672
    %v1446 = vadd.f32 %v1442, -0.28449672
    %v1447 = vadd.f32 %v1443, -0.28449672
    %v1448 = vadd.f32 %v1444, -0.28449672
    %v1449 = vmul.f32 %v1445, %v1418
    %v1450 = vmul.f32 %v1446, %v1420
    %v1451 = vmul.f32 %v1447, %v1422
    %v1452 = vmul.f32 %v1448, %v1424
    %v1453 = vadd.f32 %v1449, 0.2548296
    %v1454 = vadd.f32 %v1450, 0.2548296
    %v1455 = vadd.f32 %v1451, 0.2548296
    %v1456 = vadd.f32 %v1452, 0.2548296
    %v1457 = vmul.f32 %v1453, %v1418
    %v1458 = vmul.f32 %v1454, %v1420
    %v1459 = vmul.f32 %v1455, %v1422
    %v1460 = vmul.f32 %v1456, %v1424
    %v1461 = vsub.f32 0.0, %v1405
    %v1462 = vsub.f32 0.0, %v1406
    %v1463 = vsub.f32 0.0, %v1407
    %v1464 = vsub.f32 0.0, %v1408
    %v1465 = vmul.f32 %v1461, %v1405
    %v1466 = vmul.f32 %v1462, %v1406
    %v1467 = vmul.f32 %v1463, %v1407
    %v1468 = vmul.f32 %v1464, %v1408
    %v1469 = vmul.f32 %v1465, 1.442695
    %v1470 = vpow.pop %v1469
    %v1471 = vmul.f32 %v1466, 1.442695
    %v1472 = vpow.pop %v1471
    %v1473 = vmul.f32 %v1467, 1.442695
    %v1474 = vpow.pop %v1473
    %v1475 = vmul.f32 %v1468, 1.442695
    %v1476 = vpow.pop %v1475
    %v1477 = vmul.f32 %v1457, %v1470
    %v1478 = vmul.f32 %v1458, %v1472
    %v1479 = vmul.f32 %v1459, %v1474
    %v1480 = vmul.f32 %v1460, %v1476
    %v1481 = vsub.f32 1.0, %v1477
    %v1482 = vsub.f32 1.0, %v1478
    %v1483 = vsub.f32 1.0, %v1479
    %v1484 = vsub.f32 1.0, %v1480
    %vm1485 = vcmp.lt.f32.partialorder %v1401, 0.0
    %vm1486 = vcmp.lt.f32.partialorder %v1402, 0.0
    %vm1487 = vcmp.lt.f32.partialorder %v1403, 0.0
    %vm1488 = vcmp.lt.f32.partialorder %v1404, 0.0
    %v1489 = vsub.f32 0.0, %v1481
    %v1490 = vsub.f32 0.0, %v1482
    %v1491 = vsub.f32 0.0, %v1483
    %v1492 = vsub.f32 0.0, %v1484
    %v1493 = vsel %vm1485, %v1489, %v1481
    %v1494 = vsel %vm1486, %v1490, %v1482
    %v1495 = vsel %vm1487, %v1491, %v1483
    %v1496 = vsel %vm1488, %v1492, %v1484
    %v1497 = vadd.f32 %v1493, 1.0
    %v1498 = vadd.f32 %v1494, 1.0
    %v1499 = vadd.f32 %v1495, 1.0
    %v1500 = vadd.f32 %v1496, 1.0
    %v1501 = vmul.f32 %v1397, %v1497
    %v1502 = vmul.f32 %v1398, %v1498
    %v1503 = vmul.f32 %v1399, %v1499
    %v1504 = vmul.f32 %v1400, %v1500
    %1505 = vrot.lane.b32.xlu0 %v1501, 127
    %v1506 = vpop.permute.xlu0 %1505
    %1507 = vrot.lane.b32.xlu0 %v1502, 127
    %v1508 = vpop.permute.xlu0 %1507
    %1509 = vrot.lane.b32.xlu0 %v1503, 127
    %v1510 = vpop.permute.xlu0 %1509
    %1511 = vrot.lane.b32.xlu0 %v1504, 127
    %v1512 = vpop.permute.xlu0 %1511
    %v1513 = vsel %vm290, %v1510, %v1512
    %v1514 = vsel %vm290, %v1508, %v1510
    %v1515 = vsel %vm290, %v1506, %v1508
    %v1516 = vsel %vm290, %v1512, %v1506
    %v1517 = vmax.f32 %v1501, %v1515
    %v1518 = vmax.f32 %v1502, %v1514
    %v1519 = vmax.f32 %v1503, %v1513
    %v1520 = vmax.f32 %v1504, %v1516
    %1521 = vrot.lane.b32.xlu0 %v1517, 112
    %v1522 = vpop.permute.xlu0 %1521
    %1523 = vrot.lane.b32.xlu0 %v1518, 112
    %v1524 = vpop.permute.xlu0 %1523
    %1525 = vrot.lane.b32.xlu0 %v1519, 112
    %v1526 = vpop.permute.xlu0 %1525
    %1527 = vrot.lane.b32.xlu0 %v1520, 112
    %v1528 = vpop.permute.xlu0 %1527
    %v1529 = vsel %vm390, %v1526, %v1528
    %v1530 = vsel %vm390, %v1524, %v1526
    %v1531 = vsel %vm390, %v1522, %v1524
    %v1532 = vsel %vm390, %v1528, %v1522
    %v1533 = vmax.f32 %v1517, %v1531
    %v1534 = vmax.f32 %v1518, %v1530
    %v1535 = vmax.f32 %v1519, %v1529
    %v1536 = vmax.f32 %v1520, %v1532
    %v1537 = vld [vmem:[#allocation7] sm:$0xff]
    %v1538 = vld [vmem:[#allocation7 + $0x8] sm:$0xff]
    %v1539 = vld [vmem:[#allocation7 + $0x10] sm:$0xff]
    %v1540 = vld [vmem:[#allocation7 + $0x18] sm:$0xff]
    %v1541 = vld [vmem:[#allocation7 + $0x20] sm:$0xff]
    %v1542 = vld [vmem:[#allocation7 + $0x28] sm:$0xff]
    %v1543 = vld [vmem:[#allocation7 + $0x30] sm:$0xff]
    %v1544 = vld [vmem:[#allocation7 + $0x38] sm:$0xff]
    %v1545 = vld [vmem:[#allocation7 + $0x40] sm:$0xff]
    %v1546 = vld [vmem:[#allocation7 + $0x48] sm:$0xff]
    %v1547 = vld [vmem:[#allocation7 + $0x50] sm:$0xff]
    %v1548 = vld [vmem:[#allocation7 + $0x58] sm:$0xff]
    %v1549 = vld [vmem:[#allocation7 + $0x60] sm:$0xff]
    %v1550 = vld [vmem:[#allocation7 + $0x68] sm:$0xff]
    %v1551 = vld [vmem:[#allocation7 + $0x70] sm:$0xff]
    %v1552 = vld [vmem:[#allocation7 + $0x78] sm:$0xff]
    %v1553 = vld [vmem:[#allocation7 + $0x80] sm:$0xff]
    %v1554 = vld [vmem:[#allocation7 + $0x88] sm:$0xff]
    %v1555 = vld [vmem:[#allocation7 + $0x90] sm:$0xff]
    %v1556 = vld [vmem:[#allocation7 + $0x98] sm:$0xff]
    %v1557 = vld [vmem:[#allocation7 + $0xa0] sm:$0xff]
    %v1558 = vld [vmem:[#allocation7 + $0xa8] sm:$0xff]
    %v1559 = vld [vmem:[#allocation7 + $0xb0] sm:$0xff]
    %v1560 = vld [vmem:[#allocation7 + $0xb8] sm:$0xff]
    %v1561 = vld [vmem:[#allocation7 + $0xc0] sm:$0xff]
    %v1562 = vld [vmem:[#allocation7 + $0xc8] sm:$0xff]
    %v1563 = vld [vmem:[#allocation7 + $0xd0] sm:$0xff]
    %v1564 = vld [vmem:[#allocation7 + $0xd8] sm:$0xff]
    %v1565 = vld [vmem:[#allocation7 + $0xe0] sm:$0xff]
    %v1566 = vld [vmem:[#allocation7 + $0xe8] sm:$0xff]
    %v1567 = vld [vmem:[#allocation7 + $0xf0] sm:$0xff]
    %v1568 = vld [vmem:[#allocation7 + $0xf8] sm:$0xff]
    %v1569 = vld [vmem:[#allocation7 + $0x100] sm:$0xff]
    %v1570 = vld [vmem:[#allocation7 + $0x108] sm:$0xff]
    %v1571 = vld [vmem:[#allocation7 + $0x110] sm:$0xff]
    %v1572 = vld [vmem:[#allocation7 + $0x118] sm:$0xff]
    %v1573 = vld [vmem:[#allocation7 + $0x120] sm:$0xff]
    %v1574 = vld [vmem:[#allocation7 + $0x128] sm:$0xff]
    %v1575 = vld [vmem:[#allocation7 + $0x130] sm:$0xff]
    %v1576 = vld [vmem:[#allocation7 + $0x138] sm:$0xff]
    %v1577 = vld [vmem:[#allocation7 + $0x140] sm:$0xff]
    %v1578 = vld [vmem:[#allocation7 + $0x148] sm:$0xff]
    %v1579 = vld [vmem:[#allocation7 + $0x150] sm:$0xff]
    %v1580 = vld [vmem:[#allocation7 + $0x158] sm:$0xff]
    %v1581 = vld [vmem:[#allocation7 + $0x160] sm:$0xff]
    %v1582 = vld [vmem:[#allocation7 + $0x168] sm:$0xff]
    %v1583 = vld [vmem:[#allocation7 + $0x170] sm:$0xff]
    %v1584 = vld [vmem:[#allocation7 + $0x178] sm:$0xff]
    %v1585 = vld [vmem:[#allocation7 + $0x180] sm:$0xff]
    %v1586 = vld [vmem:[#allocation7 + $0x188] sm:$0xff]
    %v1587 = vld [vmem:[#allocation7 + $0x190] sm:$0xff]
    %v1588 = vld [vmem:[#allocation7 + $0x198] sm:$0xff]
    %v1589 = vld [vmem:[#allocation7 + $0x1a0] sm:$0xff]
    %v1590 = vld [vmem:[#allocation7 + $0x1a8] sm:$0xff]
    %v1591 = vld [vmem:[#allocation7 + $0x1b0] sm:$0xff]
    %v1592 = vld [vmem:[#allocation7 + $0x1b8] sm:$0xff]
    %v1593 = vld [vmem:[#allocation7 + $0x1c0] sm:$0xff]
    %v1594 = vld [vmem:[#allocation7 + $0x1c8] sm:$0xff]
    %v1595 = vld [vmem:[#allocation7 + $0x1d0] sm:$0xff]
    %v1596 = vld [vmem:[#allocation7 + $0x1d8] sm:$0xff]
    %v1597 = vld [vmem:[#allocation7 + $0x1e0] sm:$0xff]
    %v1598 = vld [vmem:[#allocation7 + $0x1e8] sm:$0xff]
    %v1599 = vld [vmem:[#allocation7 + $0x1f0] sm:$0xff]
    %v1600 = vld [vmem:[#allocation7 + $0x1f8] sm:$0xff]
    %1601 = vmatprep.subr.mxu0 0.0
    %1602 = vmatpush1.msra.mxu0 %v1537
    %1603 = vmatprep.subr.mxu0 0.0
    %1604 = vmatpush1.msra.mxu0 %v1538
    %1605 = vmatprep.subr.mxu0 0.0
    %1606 = vmatpush1.msra.mxu0 %v1539
    %1607 = vmatprep.subr.mxu0 0.0
    %1608 = vmatpush1.msra.mxu0 %v1540
    %1609 = vmatprep.subr.mxu0 0.0
    %1610 = vmatpush1.msra.mxu0 %v1541
    %1611 = vmatprep.subr.mxu0 0.0
    %1612 = vmatpush1.msra.mxu0 %v1542
    %1613 = vmatprep.subr.mxu0 0.0
    %1614 = vmatpush1.msra.mxu0 %v1543
    %1615 = vmatprep.subr.mxu0 0.0
    %1616 = vmatpush1.msra.mxu0 %v1544
    %1617 = vmatprep.subr.mxu0 0.0
    %1618 = vmatpush1.msra.mxu0 %v1545
    %1619 = vmatprep.subr.mxu0 0.0
    %1620 = vmatpush1.msra.mxu0 %v1546
    %1621 = vmatprep.subr.mxu0 0.0
    %1622 = vmatpush1.msra.mxu0 %v1547
    %1623 = vmatprep.subr.mxu0 0.0
    %1624 = vmatpush1.msra.mxu0 %v1548
    %1625 = vmatprep.subr.mxu0 0.0
    %1626 = vmatpush1.msra.mxu0 %v1549
    %1627 = vmatprep.subr.mxu0 0.0
    %1628 = vmatpush1.msra.mxu0 %v1550
    %1629 = vmatprep.subr.mxu0 0.0
    %1630 = vmatpush1.msra.mxu0 %v1551
    %1631 = vmatprep.subr.mxu0 0.0
    %1632 = vmatpush1.msra.mxu0 %v1552
    %1633 = vmatprep.subr.mxu0 0.0
    %1634 = vmatpush1.msra.mxu0 %v1553
    %1635 = vmatprep.subr.mxu0 0.0
    %1636 = vmatpush1.msra.mxu0 %v1554
    %1637 = vmatprep.subr.mxu0 0.0
    %1638 = vmatpush1.msra.mxu0 %v1555
    %1639 = vmatprep.subr.mxu0 0.0
    %1640 = vmatpush1.msra.mxu0 %v1556
    %1641 = vmatprep.subr.mxu0 0.0
    %1642 = vmatpush1.msra.mxu0 %v1557
    %1643 = vmatprep.subr.mxu0 0.0
    %1644 = vmatpush1.msra.mxu0 %v1558
    %1645 = vmatprep.subr.mxu0 0.0
    %1646 = vmatpush1.msra.mxu0 %v1559
    %1647 = vmatprep.subr.mxu0 0.0
    %1648 = vmatpush1.msra.mxu0 %v1560
    %1649 = vmatprep.subr.mxu0 0.0
    %1650 = vmatpush1.msra.mxu0 %v1561
    %1651 = vmatprep.subr.mxu0 0.0
    %1652 = vmatpush1.msra.mxu0 %v1562
    %1653 = vmatprep.subr.mxu0 0.0
    %1654 = vmatpush1.msra.mxu0 %v1563
    %1655 = vmatprep.subr.mxu0 0.0
    %1656 = vmatpush1.msra.mxu0 %v1564
    %1657 = vmatprep.subr.mxu0 0.0
    %1658 = vmatpush1.msra.mxu0 %v1565
    %1659 = vmatprep.subr.mxu0 0.0
    %1660 = vmatpush1.msra.mxu0 %v1566
    %1661 = vmatprep.subr.mxu0 0.0
    %1662 = vmatpush1.msra.mxu0 %v1567
    %1663 = vmatprep.subr.mxu0 0.0
    %1664 = vmatpush1.msra.mxu0 %v1568
    %1665 = vmatprep.mubr.f32.mxu0 %v1534
    %1666 = vmatmul.mubr.f32.gmra.mrb[0].mxu0 %v1533
    %v1667 = vpop.f32.mrb[0].mxu0
    %v1668 = vadd.f32 0.0, %v1667
    %v1669 = vpop.f32.mrb[0].mxu0
    %1670 = vdwg.mxu0
    %1671 = vmatprep.subr.mxu0 0.0
    %1672 = vmatpush1.msra.mxu0 %v1569
    %1673 = vmatprep.subr.mxu0 0.0
    %1674 = vmatpush1.msra.mxu0 %v1570
    %1675 = vmatprep.subr.mxu0 0.0
    %1676 = vmatpush1.msra.mxu0 %v1571
    %1677 = vmatprep.subr.mxu0 0.0
    %1678 = vmatpush1.msra.mxu0 %v1572
    %1679 = vmatprep.subr.mxu0 0.0
    %1680 = vmatpush1.msra.mxu0 %v1573
    %1681 = vmatprep.subr.mxu0 0.0
    %1682 = vmatpush1.msra.mxu0 %v1574
    %1683 = vmatprep.subr.mxu0 0.0
    %1684 = vmatpush1.msra.mxu0 %v1575
    %1685 = vmatprep.subr.mxu0 0.0
    %1686 = vmatpush1.msra.mxu0 %v1576
    %1687 = vmatprep.subr.mxu0 0.0
    %1688 = vmatpush1.msra.mxu0 %v1577
    %1689 = vmatprep.subr.mxu0 0.0
    %1690 = vmatpush1.msra.mxu0 %v1578
    %1691 = vmatprep.subr.mxu0 0.0
    %1692 = vmatpush1.msra.mxu0 %v1579
    %1693 = vmatprep.subr.mxu0 0.0
    %1694 = vmatpush1.msra.mxu0 %v1580
    %1695 = vmatprep.subr.mxu0 0.0
    %1696 = vmatpush1.msra.mxu0 %v1581
    %1697 = vmatprep.subr.mxu0 0.0
    %1698 = vmatpush1.msra.mxu0 %v1582
    %1699 = vmatprep.subr.mxu0 0.0
    %1700 = vmatpush1.msra.mxu0 %v1583
    %1701 = vmatprep.subr.mxu0 0.0
    %1702 = vmatpush1.msra.mxu0 %v1584
    %1703 = vmatprep.subr.mxu0 0.0
    %1704 = vmatpush1.msra.mxu0 %v1585
    %1705 = vmatprep.subr.mxu0 0.0
    %1706 = vmatpush1.msra.mxu0 %v1586
    %1707 = vmatprep.subr.mxu0 0.0
    %1708 = vmatpush1.msra.mxu0 %v1587
    %1709 = vmatprep.subr.mxu0 0.0
    %1710 = vmatpush1.msra.mxu0 %v1588
    %1711 = vmatprep.subr.mxu0 0.0
    %1712 = vmatpush1.msra.mxu0 %v1589
    %1713 = vmatprep.subr.mxu0 0.0
    %1714 = vmatpush1.msra.mxu0 %v1590
    %1715 = vmatprep.subr.mxu0 0.0
    %1716 = vmatpush1.msra.mxu0 %v1591
    %1717 = vmatprep.subr.mxu0 0.0
    %1718 = vmatpush1.msra.mxu0 %v1592
    %1719 = vmatprep.subr.mxu0 0.0
    %1720 = vmatpush1.msra.mxu0 %v1593
    %1721 = vmatprep.subr.mxu0 0.0
    %1722 = vmatpush1.msra.mxu0 %v1594
    %1723 = vmatprep.subr.mxu0 0.0
    %1724 = vmatpush1.msra.mxu0 %v1595
    %1725 = vmatprep.subr.mxu0 0.0
    %1726 = vmatpush1.msra.mxu0 %v1596
    %1727 = vmatprep.subr.mxu0 0.0
    %1728 = vmatpush1.msra.mxu0 %v1597
    %1729 = vmatprep.subr.mxu0 0.0
    %1730 = vmatpush1.msra.mxu0 %v1598
    %1731 = vmatprep.subr.mxu0 0.0
    %1732 = vmatpush1.msra.mxu0 %v1599
    %1733 = vmatprep.subr.mxu0 0.0
    %1734 = vmatpush1.msra.mxu0 %v1600
    %1735 = vmatprep.mubr.f32.mxu0 %v1536
    %1736 = vmatmul.mubr.f32.gmra.mrb[0].mxu0 %v1535
    %v1737 = vpop.f32.mrb[0].mxu0
    %v1738 = vadd.f32 %v1668, %v1737
    %v1739 = vpop.f32.mrb[0].mxu0
    %1740 = vdwg.mxu0
    %1741 = vst [vmem:[#allocation9] sm:$0xff] %v1738
    // Predicated region
    $region54: #{tpu_custom_call.1} parent=1 // pred_check
      _
    $region55: #{tpu_custom_call.1} parent=1 // pred_check_branch
      %1743 = sbr.rel (0) target = $region57
    $region56: #{tpu_custom_call.1} parent=1 // pred_region
      %s1745 = ssub.s32 128, 128
      %1746 = vsyncadd [#allocation6], %s1745
      %s1748 = sshll.u32 [#allocation9], 4
      %s1749 = int_to_ptr.vmem [resolvable:$true] %s1748
      %1751 = dma.vmem_to_hbm [thread:$0]  %s1749, 128, %s11, [#allocation6]
    $region57: #{tpu_custom_call.1} parent=1 // pred_fallthru
      _
    // Predicated region
    $region58: #{tpu_custom_call.1} parent=1 // pred_check
      _
    $region59: #{tpu_custom_call.1} parent=1 // pred_check_branch
      %1753 = sbr.rel (0) target = $region61
    $region60: #{tpu_custom_call.1} parent=1 // pred_region
      %1754 = dma.done [#allocation6], 128
    $region61: #{tpu_custom_call.1} parent=1 // pred_fallthru
      _
    %1755 = vsyncpa [#allocation5], 1
    %1756 = vsyncpa [#allocation8], 1
    %1757 = vsyncpa [#allocation6], 1

</llo_original>
